<compile_context>
chip_gen: v5e
topology: v5e:2x2
jax: 0.10.0
libtpu: 0.0.40
codegen_flags: <defaults>
</compile_context>

<pallas_src>
import jax
import jax.numpy as jnp
from jax.experimental import pallas as pl
from jax.experimental.pallas import tpu as pltpu


def critic_kernel(x_ref,           # (n_features, B_pad) f32, VMEM-resident
                  w1_ref, b1_ref,  # (512, nf)  bf16, (512, 1) f32
                  w2_ref, b2_ref,  # (256, 512) bf16, (256, 1) f32
                  w3_ref, b3_ref,  # (128, 256) bf16, (128, 1) f32
                  w4_ref,          # (128, 1)   f32
                  b4_ref,          # (1,)       f32, SMEM scalar
                  o_ref):          # (1, tile_b) f32, lane-dense output block
    tile_b = o_ref.shape[-1]
    start = pl.multiple_of(pl.program_id(0) * tile_b, tile_b)
    xt = x_ref[:, pl.ds(start, tile_b)].astype(jnp.bfloat16)     # (nf, tile_b)

    # fc1 + ReLU  (MXU bf16 / f32 accumulate; epilogue in f32 -- v5e has no bf16 VPU)
    # TODO(synk): bf16 bias+ReLU epilogue on v6e/v7x (bf16 VPU) would halve VALU width.
    h1 = jnp.dot(w1_ref[...], xt, preferred_element_type=jnp.float32) + b1_ref[...]
    h1 = jnp.maximum(h1, 0.0).astype(jnp.bfloat16)                # (512, tile_b)

    # fc2 + ReLU
    h2 = jnp.dot(w2_ref[...], h1, preferred_element_type=jnp.float32) + b2_ref[...]
    h2 = jnp.maximum(h2, 0.0).astype(jnp.bfloat16)                # (256, tile_b)

    # fc3 + ReLU (keep f32 for the final reduction)
    h3 = jnp.dot(w3_ref[...], h2, preferred_element_type=jnp.float32) + b3_ref[...]
    h3 = jnp.maximum(h3, 0.0)                                     # (128, tile_b)

    # fc4 (128 -> 1): VPU multiply + sublane (XLU) reduction instead of an N=1
    # MXU matmul; the result is already lane-dense.
    v = jnp.sum(h3 * w4_ref[...], axis=0, keepdims=True) + b4_ref[0]   # (1, tile_b)
    o_ref[...] = v.astype(o_ref.dtype)


def _choose_tile_b(batch):
    # Cover the batch in a handful of grid steps (per-step overhead ~0.35-0.6 us),
    # keep >=2 tiles once B > 128 so v7x's two TensorCores both get work, and
    # prefer 256/512-row tiles (v6e/v7x MXU passes are 256 wide) for big batches.
    if batch <= 256:
        return 128
    if batch <= 1024:
        return 256
    return 512


def critic_forward(x, params, *, tile_b=None):
    """CriticNet forward as one Pallas TPU kernel.

    x: (B, n_features) float32
    params: dict with w1..w4 as (in, out) f32, b1..b4 as (1, out) f32
    returns: (B, 1) float32
    """
    B, n_features = x.shape
    if tile_b is None:
        tile_b = _choose_tile_b(B)
    assert tile_b % 128 == 0, "tile_b must be a multiple of 128 (lane width)"

    num_tiles = -(-B // tile_b)
    B_pad = num_tiles * tile_b
    if B_pad != B:
        x = jnp.pad(x, ((0, B_pad - B), (0, 0)))
    xt = x.T                                                # (n_features, B_pad)

    bf = jnp.bfloat16
    # Transposed (== PyTorch Linear.weight) layout: (out_features, in_features).
    w1 = params["w1"].T.astype(bf)                          # (512, nf)
    w2 = params["w2"].T.astype(bf)                          # (256, 512)
    w3 = params["w3"].T.astype(bf)                          # (128, 256)
    w4 = params["w4"].reshape(-1, 1).astype(jnp.float32)    # (128, 1)
    b1 = params["b1"].reshape(-1, 1)                        # (512, 1) f32
    b2 = params["b2"].reshape(-1, 1)                        # (256, 1) f32
    b3 = params["b3"].reshape(-1, 1)                        # (128, 1) f32
    b4 = params["b4"].reshape(-1)                           # (1,)     f32 -> SMEM

    const = lambda i: (0, 0)   # fetched once, VMEM-resident for the whole grid

    def resident(a):
        # Constant-index blocks are never revisited with a new index: single-buffer
        # them (no second ~340 KB buffer set / rotation bookkeeping).
        return pl.BlockSpec(a.shape, const, pipeline_mode=pl.Buffered(1))

    grid_spec = pltpu.PrefetchScalarGridSpec(
        num_scalar_prefetch=0,
        grid=(num_tiles,),
        in_specs=[
            resident(xt),                    # whole x^T; sliced in-kernel via pl.ds
            resident(w1), resident(b1),
            resident(w2), resident(b2),
            resident(w3), resident(b3),
            resident(w4),
            pl.BlockSpec(memory_space=pltpu.MemorySpace.SMEM),   # b4 scalar
        ],
        out_specs=pl.BlockSpec((1, tile_b), lambda i: (0, i)),   # lane-dense output
    )

    out = pl.pallas_call(
        critic_kernel,
        out_shape=jax.ShapeDtypeStruct((1, B_pad), jnp.float32),
        grid_spec=grid_spec,
        compiler_params=pltpu.CompilerParams(
            dimension_semantics=("parallel",)),   # dual-TC sharding on v7x
    )(xt, w1, b1, w2, b2, w3, b3, w4, b4)

    return out[0, :B].reshape(B, 1)


def init_params(key, n_features):
    """Deterministic init mirroring torch.nn.Linear default U(-1/sqrt(fan_in), +)."""
    dims = [(n_features, 512), (512, 256), (256, 128), (128, 1)]
    params = {}
    for i, (fan_in, fan_out) in enumerate(dims, start=1):
        key, kw, kb = jax.random.split(key, 3)
        bound = 1.0 / jnp.sqrt(jnp.float32(fan_in))
        params[f"w{i}"] = jax.random.uniform(
            kw, (fan_in, fan_out), jnp.float32, -bound, bound)
        params[f"b{i}"] = jax.random.uniform(
            kb, (1, fan_out), jnp.float32, -bound, bound)
    return params


def reference_forward(x, p):
    """Pure f32 reference matching the PyTorch module."""
    h = jnp.maximum(x @ p["w1"] + p["b1"], 0.0)
    h = jnp.maximum(h @ p["w2"] + p["b2"], 0.0)
    h = jnp.maximum(h @ p["w3"] + p["b3"], 0.0)
    return h @ p["w4"] + p["b4"]


def reference_forward_mixed(x, p):
    """Reference matching the kernel's transposed bf16-matmul / f32-accumulate math."""
    bf = jnp.bfloat16
    xt = x.T.astype(bf)
    h = jnp.maximum(jnp.dot(p["w1"].T.astype(bf), xt,
                            preferred_element_type=jnp.float32)
                    + p["b1"].reshape(-1, 1), 0.0)
    h = jnp.maximum(jnp.dot(p["w2"].T.astype(bf), h.astype(bf),
                            preferred_element_type=jnp.float32)
                    + p["b2"].reshape(-1, 1), 0.0)
    h = jnp.maximum(jnp.dot(p["w3"].T.astype(bf), h.astype(bf),
                            preferred_element_type=jnp.float32)
                    + p["b3"].reshape(-1, 1), 0.0)
    v = (jnp.sum(h * p["w4"].reshape(-1, 1), axis=0, keepdims=True)
         + p["b4"].reshape(1, 1))
    return v.T   # (B, 1)


if __name__ == "__main__":
    key = jax.random.PRNGKey(0)
    n_features = 3     # Pendulum-v1 observation dim
    batch = 200        # not a multiple of the 128-row tile -> exercises padding,
                       # and gives 2 grid tiles (keeps both v7x TCs busy)

    kp, kx = jax.random.split(key)
    params = init_params(kp, n_features)
    x = jax.random.normal(kx, (batch, n_features), jnp.float32)

    out = critic_forward(x, params)
    out = jax.block_until_ready(out)

    assert out.shape == (batch, 1)

    # Tight check vs a reference using the same mixed-precision math.
    ref_mixed = reference_forward_mixed(x, params)
    assert jnp.allclose(out, ref_mixed, atol=1e-4, rtol=1e-4)

    # Semantic check vs the full-f32 PyTorch-equivalent forward.
    ref_f32 = reference_forward(x, params)
    assert jnp.allclose(out, ref_f32, atol=1e-2, rtol=1e-2)

    print("KERNEL_OK")
</pallas_src>

<mosaic_0001>
module attributes {stable_mosaic.version = 11 : i64} {
  func.func @critic_kernel(%arg0: i32, %arg1: memref<3x256xf32, #tpu.memory_space<vmem>>, %arg2: memref<512x3xbf16, #tpu.memory_space<vmem>>, %arg3: memref<512x1xf32, #tpu.memory_space<vmem>>, %arg4: memref<256x512xbf16, #tpu.memory_space<vmem>>, %arg5: memref<256x1xf32, #tpu.memory_space<vmem>>, %arg6: memref<128x256xbf16, #tpu.memory_space<vmem>>, %arg7: memref<128x1xf32, #tpu.memory_space<vmem>>, %arg8: memref<128x1xf32, #tpu.memory_space<vmem>>, %arg9: memref<1xf32, #tpu.memory_space<smem>>, %arg10: memref<1x128xf32, #tpu.memory_space<vmem>>) attributes {dimension_semantics = [#tpu.dimension_semantics<parallel>], iteration_bounds = array<i64: 2>, scalar_prefetch = 0 : i64, scratch_operands = 0 : i64, tpu.core_type = #tpu.core_type<tc>, window_params = [{pipeline_mode = #tpu.pipeline_mode<synchronous>, transform_indices = @transform_0, window_bounds = array<i64: 3, 256>}, {pipeline_mode = #tpu.pipeline_mode<synchronous>, transform_indices = @transform_1, window_bounds = array<i64: 512, 3>}, {pipeline_mode = #tpu.pipeline_mode<synchronous>, transform_indices = @transform_2, window_bounds = array<i64: 512, 1>}, {pipeline_mode = #tpu.pipeline_mode<synchronous>, transform_indices = @transform_3, window_bounds = array<i64: 256, 512>}, {pipeline_mode = #tpu.pipeline_mode<synchronous>, transform_indices = @transform_4, window_bounds = array<i64: 256, 1>}, {pipeline_mode = #tpu.pipeline_mode<synchronous>, transform_indices = @transform_5, window_bounds = array<i64: 128, 256>}, {pipeline_mode = #tpu.pipeline_mode<synchronous>, transform_indices = @transform_6, window_bounds = array<i64: 128, 1>}, {pipeline_mode = #tpu.pipeline_mode<synchronous>, transform_indices = @transform_7, window_bounds = array<i64: 128, 1>}, {transform_indices = @transform_8, window_bounds = array<i64: 1>}, {transform_indices = @transform_9, window_bounds = array<i64: 1, 128>}]} {
    %c128_i32 = arith.constant 128 : i32
    %0 = arith.muli %arg0, %c128_i32 : i32
    %1 = tpu.assume_multiple %0, 128 : i32
    %c0 = arith.constant 0 : index
    %2 = arith.index_cast %1 : i32 to index
    %3 = vector.load %arg1[%c0, %2] : memref<3x256xf32, #tpu.memory_space<vmem>>, vector<3x128xf32>
    %4 = arith.truncf %3 : vector<3x128xf32> to vector<3x128xbf16>
    %c0_0 = arith.constant 0 : index
    %c0_1 = arith.constant 0 : index
    %5 = vector.load %arg2[%c0_0, %c0_1] : memref<512x3xbf16, #tpu.memory_space<vmem>>, vector<512x3xbf16>
    %cst = arith.constant dense<0.000000e+00> : vector<512x128xf32>
    %6 = tpu.matmul %5, %4, %cst {dimension_numbers = #tpu.dot_dimension_numbers<[1], [0], [0], [1], [0, 0, 1, 1], [], []>} : vector<512x3xbf16>, vector<3x128xbf16>, vector<512x128xf32> -> vector<512x128xf32>
    %c0_2 = arith.constant 0 : index
    %c0_3 = arith.constant 0 : index
    %7 = vector.load %arg3[%c0_2, %c0_3] : memref<512x1xf32, #tpu.memory_space<vmem>>, vector<512x1xf32>
    %8 = vector.broadcast %7 : vector<512x1xf32> to vector<512x128xf32>
    %9 = arith.addf %6, %8 : vector<512x128xf32>
    %cst_4 = arith.constant 0.000000e+00 : f32
    %10 = vector.broadcast %cst_4 : f32 to vector<512x128xf32>
    %11 = arith.maximumf %9, %10 : vector<512x128xf32>
    %12 = arith.truncf %11 : vector<512x128xf32> to vector<512x128xbf16>
    %c0_5 = arith.constant 0 : index
    %c0_6 = arith.constant 0 : index
    %13 = vector.load %arg4[%c0_5, %c0_6] : memref<256x512xbf16, #tpu.memory_space<vmem>>, vector<256x512xbf16>
    %cst_7 = arith.constant dense<0.000000e+00> : vector<256x128xf32>
    %14 = tpu.matmul %13, %12, %cst_7 {dimension_numbers = #tpu.dot_dimension_numbers<[1], [0], [0], [1], [0, 0, 1, 1], [], []>} : vector<256x512xbf16>, vector<512x128xbf16>, vector<256x128xf32> -> vector<256x128xf32>
    %c0_8 = arith.constant 0 : index
    %c0_9 = arith.constant 0 : index
    %15 = vector.load %arg5[%c0_8, %c0_9] : memref<256x1xf32, #tpu.memory_space<vmem>>, vector<256x1xf32>
    %16 = vector.broadcast %15 : vector<256x1xf32> to vector<256x128xf32>
    %17 = arith.addf %14, %16 : vector<256x128xf32>
    %cst_10 = arith.constant 0.000000e+00 : f32
    %18 = vector.broadcast %cst_10 : f32 to vector<256x128xf32>
    %19 = arith.maximumf %17, %18 : vector<256x128xf32>
    %20 = arith.truncf %19 : vector<256x128xf32> to vector<256x128xbf16>
    %c0_11 = arith.constant 0 : index
    %c0_12 = arith.constant 0 : index
    %21 = vector.load %arg6[%c0_11, %c0_12] : memref<128x256xbf16, #tpu.memory_space<vmem>>, vector<128x256xbf16>
    %cst_13 = arith.constant dense<0.000000e+00> : vector<128x128xf32>
    %22 = tpu.matmul %21, %20, %cst_13 {dimension_numbers = #tpu.dot_dimension_numbers<[1], [0], [0], [1], [0, 0, 1, 1], [], []>} : vector<128x256xbf16>, vector<256x128xbf16>, vector<128x128xf32> -> vector<128x128xf32>
    %c0_14 = arith.constant 0 : index
    %c0_15 = arith.constant 0 : index
    %23 = vector.load %arg7[%c0_14, %c0_15] : memref<128x1xf32, #tpu.memory_space<vmem>>, vector<128x1xf32>
    %24 = vector.broadcast %23 : vector<128x1xf32> to vector<128x128xf32>
    %25 = arith.addf %22, %24 : vector<128x128xf32>
    %cst_16 = arith.constant 0.000000e+00 : f32
    %26 = vector.broadcast %cst_16 : f32 to vector<128x128xf32>
    %27 = arith.maximumf %25, %26 : vector<128x128xf32>
    %c0_17 = arith.constant 0 : index
    %c0_18 = arith.constant 0 : index
    %28 = vector.load %arg8[%c0_17, %c0_18] : memref<128x1xf32, #tpu.memory_space<vmem>>, vector<128x1xf32>
    %29 = vector.broadcast %28 : vector<128x1xf32> to vector<128x128xf32>
    %30 = arith.mulf %27, %29 : vector<128x128xf32>
    %cst_19 = arith.constant dense<0.000000e+00> : vector<128xf32>
    %31 = vector.multi_reduction <add>, %30, %cst_19 [0] : vector<128x128xf32> to vector<128xf32>
    %32 = vector.shape_cast %31 : vector<128xf32> to vector<1x128xf32>
    %c0_20 = arith.constant 0 : index
    %33 = memref.load %arg9[%c0_20] : memref<1xf32, #tpu.memory_space<smem>>
    %34 = vector.broadcast %33 : f32 to vector<1x128xf32>
    %35 = arith.addf %32, %34 : vector<1x128xf32>
    %c0_21 = arith.constant 0 : index
    %c0_22 = arith.constant 0 : index
    %36 = vector.load %arg10[%c0_21, %c0_22] : memref<1x128xf32, #tpu.memory_space<vmem>>, vector<1x128xf32>
    tpu.vector_store %arg10[%c0_21, %c0_22], %35 {strides = array<i32>} : memref<1x128xf32, #tpu.memory_space<vmem>>, vector<1x128xf32>,
    return
  }
  func.func @transform_0(%arg0: i32) -> (i32, i32) {
    %c0_i32 = arith.constant 0 : i32
    %c0_i32_0 = arith.constant 0 : i32
    %c0_i32_1 = arith.constant 0 : i32
    return %c0_i32, %c0_i32_0 : i32, i32
  }
  func.func @transform_1(%arg0: i32) -> (i32, i32) {
    %c0_i32 = arith.constant 0 : i32
    %c0_i32_0 = arith.constant 0 : i32
    %c0_i32_1 = arith.constant 0 : i32
    return %c0_i32, %c0_i32_0 : i32, i32
  }
  func.func @transform_2(%arg0: i32) -> (i32, i32) {
    %c0_i32 = arith.constant 0 : i32
    %c0_i32_0 = arith.constant 0 : i32
    %c0_i32_1 = arith.constant 0 : i32
    return %c0_i32, %c0_i32_0 : i32, i32
  }
  func.func @transform_3(%arg0: i32) -> (i32, i32) {
    %c0_i32 = arith.constant 0 : i32
    %c0_i32_0 = arith.constant 0 : i32
    %c0_i32_1 = arith.constant 0 : i32
    return %c0_i32, %c0_i32_0 : i32, i32
  }
  func.func @transform_4(%arg0: i32) -> (i32, i32) {
    %c0_i32 = arith.constant 0 : i32
    %c0_i32_0 = arith.constant 0 : i32
    %c0_i32_1 = arith.constant 0 : i32
    return %c0_i32, %c0_i32_0 : i32, i32
  }
  func.func @transform_5(%arg0: i32) -> (i32, i32) {
    %c0_i32 = arith.constant 0 : i32
    %c0_i32_0 = arith.constant 0 : i32
    %c0_i32_1 = arith.constant 0 : i32
    return %c0_i32, %c0_i32_0 : i32, i32
  }
  func.func @transform_6(%arg0: i32) -> (i32, i32) {
    %c0_i32 = arith.constant 0 : i32
    %c0_i32_0 = arith.constant 0 : i32
    %c0_i32_1 = arith.constant 0 : i32
    return %c0_i32, %c0_i32_0 : i32, i32
  }
  func.func @transform_7(%arg0: i32) -> (i32, i32) {
    %c0_i32 = arith.constant 0 : i32
    %c0_i32_0 = arith.constant 0 : i32
    %c0_i32_1 = arith.constant 0 : i32
    return %c0_i32, %c0_i32_0 : i32, i32
  }
  func.func @transform_8(%arg0: i32) -> i32 {
    %c0_i32 = arith.constant 0 : i32
    %c0_i32_0 = arith.constant 0 : i32
    return %c0_i32 : i32
  }
  func.func @transform_9(%arg0: i32) -> (i32, i32) {
    %c0_i32 = arith.constant 0 : i32
    %c0_i32_0 = arith.constant 0 : i32
    return %c0_i32, %arg0 : i32, i32
  }
}

</mosaic_0001>

<llo_original>
// kernel: tpu_custom_call.1
$region0: #{tpu_custom_call.1}
  #allocation0 [shape = 'u32[]', space=smem, size = 0x4, offset = 0x4, fixed_abs, tag = 'smem constant byte address 0x4 - core index']
  #allocation1 [shape = 'u32[72,128]{1,0:T(1,128)}', space=vmem, size = 0x9000, scoped, tag = 'internal scratch']
  #allocation2 [shape = 'f32[1]{0:T(128)S(6)}', space=smem, size = 0x200, scoped, tag = 'scoped memory for tpu_custom_call.1']
  %s0 = inlined_call_operand.vmem [shape: f32[3,256], index: 0, kind: input, shape index: {}]
  %s1 = inlined_call_operand.vmem [shape: bf16[512,3], index: 1, kind: input, shape index: {}]
  %s2 = inlined_call_operand.vmem [shape: f32[512,1], index: 2, kind: input, shape index: {}]
  %s3 = inlined_call_operand.vmem [shape: bf16[256,512], index: 3, kind: input, shape index: {}]
  %s4 = inlined_call_operand.vmem [shape: f32[256,1], index: 4, kind: input, shape index: {}]
  %s5 = inlined_call_operand.vmem [shape: bf16[128,256], index: 5, kind: input, shape index: {}]
  %s6 = inlined_call_operand.vmem [shape: f32[128,1], index: 6, kind: input, shape index: {}]
  %s7 = inlined_call_operand.vmem [shape: f32[128,1], index: 7, kind: input, shape index: {}]
  %s8 = inlined_call_operand.<no memory space> [shape: f32[1], index: 8, kind: input, shape index: {}]
  %s9 = inlined_call_operand.hbm [shape: f32[1,256], index: 9, kind: output, shape index: {}]
  %s10 = sld [smem:[#allocation0]]
  $region69: #{tpu_custom_call.1} parent=0
    _
  %s12 = ssub.s32 1, %s10
  %s13 = scalar_select 0, %s12, %s10
  %14 = sst [smem:[#allocation2]] %s8
  $region1: #{tpu_custom_call.1} parent=0
    #allocation3 [shape = 'u8[1024]{0}', space=vmem, size = 0x400, scoped, tag = 'output window, operand 0']
    #allocation4 [shape = 's32[2]{0}', space=sflag, size = 0x8, scoped, tag = 'scoped memory for tpu_custom_call.1']
    %15 = vsyncpa [#allocation4], 0
    %s16 = scalar_lea.sflag [#allocation4], 1
    %17 = vsyncpa %s16, 0
    loop: start=0, step=1, limit=4
    $region2: #{tpu_custom_call.1} parent=1 // loop_pre_header
      _
    $region3: #{tpu_custom_call.1} parent=1 // loop_header
      %s19 = sphi 0, %s23
      %p20 = scmp.ge.s32.totalorder %s19, 4
      %s27 = sphi 0, %s27
      %s29 = sphi 0, %s27
      %s30 = sphi 0, %s29
      %s44 = sphi 0, %s30
      %s48 = sphi 0, %s48
      %s50 = sphi 0, %s48
      %s51 = sphi 0, %s50
      %s65 = sphi 0, %s51
      %s69 = sphi 0, %s69
      %s71 = sphi 0, %s69
      %s72 = sphi 0, %s71
      %s86 = sphi 0, %s72
      %s90 = sphi 0, %s90
      %s92 = sphi 0, %s90
      %s93 = sphi 0, %s92
      %s107 = sphi 0, %s93
      %s111 = sphi 0, %s111
      %s113 = sphi 0, %s111
      %s114 = sphi 0, %s113
      %s128 = sphi 0, %s114
      %s132 = sphi 0, %s132
      %s134 = sphi 0, %s132
      %s135 = sphi 0, %s134
      %s149 = sphi 0, %s135
      %s153 = sphi 0, %s153
      %s155 = sphi 0, %s153
      %s156 = sphi 0, %s155
      %s170 = sphi 0, %s156
      %s174 = sphi 0, %s174
      %s176 = sphi 0, %s174
      %s177 = sphi 0, %s176
      %s191 = sphi 0, %s177
      %s195 = sphi 0, %s195
      %s197 = sphi 0, %s195
      %s198 = sphi 0, %s197
      %s212 = sphi 0, %s198
      %s218 = sphi 0, %s220
      %s221 = sphi 0, %s218
      %s222 = sphi 0, %s221
      %s238 = sphi 0, %s222
    $region4: #{tpu_custom_call.1} parent=1 // loop_header_branch
      %22 = sbr.rel (%p20) target = $region8
    $region5: #{tpu_custom_call.1} parent=1 // loop_body
      %s24 = ssub.s32 %s19, 1
      %s25 = ssub.s32 %s19, 2
      %s26 = sadd.s32 %s19, 1
      %s28 = sadd.s32 %s27, 1
      %p31 = scmp.eq.s32.totalorder %s19, 1
      %p32 = scmp.ne.s32.totalorder %s27, %s29
      %p33 = scmp.eq.s32.totalorder %s19, 0
      %p34 = por %p32, %p33
      %p35 = scmp.ne.s32.totalorder %s27, %s29
      %p36 = scmp.eq.s32.totalorder %s24, 1
      %p37 = por %p35, %p36
      %p38 = scmp.ne.s32.totalorder %s29, %s30
      %p39 = scmp.eq.s32.totalorder %s24, 0
      %p40 = por %p38, %p39
      %p41 = scmp.ne.s32.totalorder %s29, %s30
      %p42 = scmp.eq.s32.totalorder %s25, 1
      %p43 = por %p41, %p42
      %p45 = scmp.ne.s32.totalorder %s30, %s44
      %p46 = scmp.eq.s32.totalorder %s25, 0
      %p47 = por %p45, %p46
      %s49 = sadd.s32 %s48, 1
      %p52 = scmp.eq.s32.totalorder %s19, 1
      %p53 = scmp.ne.s32.totalorder %s48, %s50
      %p54 = scmp.eq.s32.totalorder %s19, 0
      %p55 = por %p53, %p54
      %p56 = scmp.ne.s32.totalorder %s48, %s50
      %p57 = scmp.eq.s32.totalorder %s24, 1
      %p58 = por %p56, %p57
      %p59 = scmp.ne.s32.totalorder %s50, %s51
      %p60 = scmp.eq.s32.totalorder %s24, 0
      %p61 = por %p59, %p60
      %p62 = scmp.ne.s32.totalorder %s50, %s51
      %p63 = scmp.eq.s32.totalorder %s25, 1
      %p64 = por %p62, %p63
      %p66 = scmp.ne.s32.totalorder %s51, %s65
      %p67 = scmp.eq.s32.totalorder %s25, 0
      %p68 = por %p66, %p67
      %s70 = sadd.s32 %s69, 1
      %p73 = scmp.eq.s32.totalorder %s19, 1
      %p74 = scmp.ne.s32.totalorder %s69, %s71
      %p75 = scmp.eq.s32.totalorder %s19, 0
      %p76 = por %p74, %p75
      %p77 = scmp.ne.s32.totalorder %s69, %s71
      %p78 = scmp.eq.s32.totalorder %s24, 1
      %p79 = por %p77, %p78
      %p80 = scmp.ne.s32.totalorder %s71, %s72
      %p81 = scmp.eq.s32.totalorder %s24, 0
      %p82 = por %p80, %p81
      %p83 = scmp.ne.s32.totalorder %s71, %s72
      %p84 = scmp.eq.s32.totalorder %s25, 1
      %p85 = por %p83, %p84
      %p87 = scmp.ne.s32.totalorder %s72, %s86
      %p88 = scmp.eq.s32.totalorder %s25, 0
      %p89 = por %p87, %p88
      %s91 = sadd.s32 %s90, 1
      %p94 = scmp.eq.s32.totalorder %s19, 1
      %p95 = scmp.ne.s32.totalorder %s90, %s92
      %p96 = scmp.eq.s32.totalorder %s19, 0
      %p97 = por %p95, %p96
      %p98 = scmp.ne.s32.totalorder %s90, %s92
      %p99 = scmp.eq.s32.totalorder %s24, 1
      %p100 = por %p98, %p99
      %p101 = scmp.ne.s32.totalorder %s92, %s93
      %p102 = scmp.eq.s32.totalorder %s24, 0
      %p103 = por %p101, %p102
      %p104 = scmp.ne.s32.totalorder %s92, %s93
      %p105 = scmp.eq.s32.totalorder %s25, 1
      %p106 = por %p104, %p105
      %p108 = scmp.ne.s32.totalorder %s93, %s107
      %p109 = scmp.eq.s32.totalorder %s25, 0
      %p110 = por %p108, %p109
      %s112 = sadd.s32 %s111, 1
      %p115 = scmp.eq.s32.totalorder %s19, 1
      %p116 = scmp.ne.s32.totalorder %s111, %s113
      %p117 = scmp.eq.s32.totalorder %s19, 0
      %p118 = por %p116, %p117
      %p119 = scmp.ne.s32.totalorder %s111, %s113
      %p120 = scmp.eq.s32.totalorder %s24, 1
      %p121 = por %p119, %p120
      %p122 = scmp.ne.s32.totalorder %s113, %s114
      %p123 = scmp.eq.s32.totalorder %s24, 0
      %p124 = por %p122, %p123
      %p125 = scmp.ne.s32.totalorder %s113, %s114
      %p126 = scmp.eq.s32.totalorder %s25, 1
      %p127 = por %p125, %p126
      %p129 = scmp.ne.s32.totalorder %s114, %s128
      %p130 = scmp.eq.s32.totalorder %s25, 0
      %p131 = por %p129, %p130
      %s133 = sadd.s32 %s132, 1
      %p136 = scmp.eq.s32.totalorder %s19, 1
      %p137 = scmp.ne.s32.totalorder %s132, %s134
      %p138 = scmp.eq.s32.totalorder %s19, 0
      %p139 = por %p137, %p138
      %p140 = scmp.ne.s32.totalorder %s132, %s134
      %p141 = scmp.eq.s32.totalorder %s24, 1
      %p142 = por %p140, %p141
      %p143 = scmp.ne.s32.totalorder %s134, %s135
      %p144 = scmp.eq.s32.totalorder %s24, 0
      %p145 = por %p143, %p144
      %p146 = scmp.ne.s32.totalorder %s134, %s135
      %p147 = scmp.eq.s32.totalorder %s25, 1
      %p148 = por %p146, %p147
      %p150 = scmp.ne.s32.totalorder %s135, %s149
      %p151 = scmp.eq.s32.totalorder %s25, 0
      %p152 = por %p150, %p151
      %s154 = sadd.s32 %s153, 1
      %p157 = scmp.eq.s32.totalorder %s19, 1
      %p158 = scmp.ne.s32.totalorder %s153, %s155
      %p159 = scmp.eq.s32.totalorder %s19, 0
      %p160 = por %p158, %p159
      %p161 = scmp.ne.s32.totalorder %s153, %s155
      %p162 = scmp.eq.s32.totalorder %s24, 1
      %p163 = por %p161, %p162
      %p164 = scmp.ne.s32.totalorder %s155, %s156
      %p165 = scmp.eq.s32.totalorder %s24, 0
      %p166 = por %p164, %p165
      %p167 = scmp.ne.s32.totalorder %s155, %s156
      %p168 = scmp.eq.s32.totalorder %s25, 1
      %p169 = por %p167, %p168
      %p171 = scmp.ne.s32.totalorder %s156, %s170
      %p172 = scmp.eq.s32.totalorder %s25, 0
      %p173 = por %p171, %p172
      %s175 = sadd.s32 %s174, 1
      %p178 = scmp.eq.s32.totalorder %s19, 1
      %p179 = scmp.ne.s32.totalorder %s174, %s176
      %p180 = scmp.eq.s32.totalorder %s19, 0
      %p181 = por %p179, %p180
      %p182 = scmp.ne.s32.totalorder %s174, %s176
      %p183 = scmp.eq.s32.totalorder %s24, 1
      %p184 = por %p182, %p183
      %p185 = scmp.ne.s32.totalorder %s176, %s177
      %p186 = scmp.eq.s32.totalorder %s24, 0
      %p187 = por %p185, %p186
      %p188 = scmp.ne.s32.totalorder %s176, %s177
      %p189 = scmp.eq.s32.totalorder %s25, 1
      %p190 = por %p188, %p189
      %p192 = scmp.ne.s32.totalorder %s177, %s191
      %p193 = scmp.eq.s32.totalorder %s25, 0
      %p194 = por %p192, %p193
      %s196 = sadd.s32 %s195, 1
      %p199 = scmp.eq.s32.totalorder %s19, 1
      %p200 = scmp.ne.s32.totalorder %s195, %s197
      %p201 = scmp.eq.s32.totalorder %s19, 0
      %p202 = por %p200, %p201
      %p203 = scmp.ne.s32.totalorder %s195, %s197
      %p204 = scmp.eq.s32.totalorder %s24, 1
      %p205 = por %p203, %p204
      %p206 = scmp.ne.s32.totalorder %s197, %s198
      %p207 = scmp.eq.s32.totalorder %s24, 0
      %p208 = por %p206, %p207
      %p209 = scmp.ne.s32.totalorder %s197, %s198
      %p210 = scmp.eq.s32.totalorder %s25, 1
      %p211 = por %p209, %p210
      %p213 = scmp.ne.s32.totalorder %s198, %s212
      %p214 = scmp.eq.s32.totalorder %s25, 0
      %p215 = por %p213, %p214
      %s216 = ssub.s32 %s19, %s26
      %p217 = scmp.eq.s32.totalorder %s216, 0
      %s219 = sadd.s32 %s218, 1
      %s220 = scalar_select %p217, %s218, %s219
      %p223 = pneg %p217
      %p224 = scmp.eq.s32.totalorder %s19, 1
      %p225 = por %p223, %p224
      %p226 = scmp.ne.s32.totalorder %s218, %s221
      %p227 = scmp.eq.s32.totalorder %s19, 0
      %p228 = por %p226, %p227
      %p229 = scmp.ne.s32.totalorder %s218, %s221
      %p230 = scmp.eq.s32.totalorder %s24, 1
      %p231 = por %p229, %p230
      %p232 = scmp.ne.s32.totalorder %s221, %s222
      %p233 = scmp.eq.s32.totalorder %s24, 0
      %p234 = por %p232, %p233
      %p235 = scmp.ne.s32.totalorder %s221, %s222
      %p236 = scmp.eq.s32.totalorder %s25, 1
      %p237 = por %p235, %p236
      %p239 = scmp.ne.s32.totalorder %s222, %s238
      %p240 = scmp.eq.s32.totalorder %s25, 0
      %p241 = por %p239, %p240
      %p242 = scmp.le.s32.totalorder 1, %s19
      %p243 = scmp.lt.s32.totalorder %s19, 3
      %p244 = pnand %p242, %p243
      %p245 = pneg %p244
      // Predicated region
      $region9: #{tpu_custom_call.1} parent=5 // pred_check
        _
      $region10: #{tpu_custom_call.1} parent=5 // pred_check_branch
        %247 = sbr.rel (%p244) target = $region12
      $region11: #{tpu_custom_call.1} parent=5 // pred_region
        %s248 = ssub.s32 %s19, 1
        // Predicated region
        $region13: #{tpu_custom_call.1} parent=11 // pred_check
          %p249 = pneg %p40
        $region14: #{tpu_custom_call.1} parent=11 // pred_check_branch
          %251 = sbr.rel (%p249) target = $region16
        $region15: #{tpu_custom_call.1} parent=11 // pred_region
          _
        $region16: #{tpu_custom_call.1} parent=11 // pred_fallthru
          _
        // Predicated region
        $region17: #{tpu_custom_call.1} parent=11 // pred_check
          %p252 = pneg %p61
        $region18: #{tpu_custom_call.1} parent=11 // pred_check_branch
          %254 = sbr.rel (%p252) target = $region20
        $region19: #{tpu_custom_call.1} parent=11 // pred_region
          _
        $region20: #{tpu_custom_call.1} parent=11 // pred_fallthru
          _
        // Predicated region
        $region21: #{tpu_custom_call.1} parent=11 // pred_check
          %p255 = pneg %p82
        $region22: #{tpu_custom_call.1} parent=11 // pred_check_branch
          %257 = sbr.rel (%p255) target = $region24
        $region23: #{tpu_custom_call.1} parent=11 // pred_region
          _
        $region24: #{tpu_custom_call.1} parent=11 // pred_fallthru
          _
        // Predicated region
        $region25: #{tpu_custom_call.1} parent=11 // pred_check
          %p258 = pneg %p103
        $region26: #{tpu_custom_call.1} parent=11 // pred_check_branch
          %260 = sbr.rel (%p258) target = $region28
        $region27: #{tpu_custom_call.1} parent=11 // pred_region
          _
        $region28: #{tpu_custom_call.1} parent=11 // pred_fallthru
          _
        // Predicated region
        $region29: #{tpu_custom_call.1} parent=11 // pred_check
          %p261 = pneg %p124
        $region30: #{tpu_custom_call.1} parent=11 // pred_check_branch
          %263 = sbr.rel (%p261) target = $region32
        $region31: #{tpu_custom_call.1} parent=11 // pred_region
          _
        $region32: #{tpu_custom_call.1} parent=11 // pred_fallthru
          _
        // Predicated region
        $region33: #{tpu_custom_call.1} parent=11 // pred_check
          %p264 = pneg %p145
        $region34: #{tpu_custom_call.1} parent=11 // pred_check_branch
          %266 = sbr.rel (%p264) target = $region36
        $region35: #{tpu_custom_call.1} parent=11 // pred_region
          _
        $region36: #{tpu_custom_call.1} parent=11 // pred_fallthru
          _
        // Predicated region
        $region37: #{tpu_custom_call.1} parent=11 // pred_check
          %p267 = pneg %p166
        $region38: #{tpu_custom_call.1} parent=11 // pred_check_branch
          %269 = sbr.rel (%p267) target = $region40
        $region39: #{tpu_custom_call.1} parent=11 // pred_region
          _
        $region40: #{tpu_custom_call.1} parent=11 // pred_fallthru
          _
        // Predicated region
        $region41: #{tpu_custom_call.1} parent=11 // pred_check
          %p270 = pneg %p187
        $region42: #{tpu_custom_call.1} parent=11 // pred_check_branch
          %272 = sbr.rel (%p270) target = $region44
        $region43: #{tpu_custom_call.1} parent=11 // pred_region
          _
        $region44: #{tpu_custom_call.1} parent=11 // pred_fallthru
          _
        // Predicated region
        $region45: #{tpu_custom_call.1} parent=11 // pred_check
          %p273 = pneg %p208
        $region46: #{tpu_custom_call.1} parent=11 // pred_check_branch
          %275 = sbr.rel (%p273) target = $region48
        $region47: #{tpu_custom_call.1} parent=11 // pred_region
          _
        $region48: #{tpu_custom_call.1} parent=11 // pred_fallthru
          _
      $region12: #{tpu_custom_call.1} parent=5 // pred_fallthru
        _
      %p276 = scmp.lt.s32.totalorder %s19, 2
      // Predicated region
      $region49: #{tpu_custom_call.1} parent=5 // pred_check
        %p277 = pneg %p276
      $region50: #{tpu_custom_call.1} parent=5 // pred_check_branch
        %279 = sbr.rel (%p277) target = $region52
      $region51: #{tpu_custom_call.1} parent=5 // pred_region
        _
      $region52: #{tpu_custom_call.1} parent=5 // pred_fallthru
        _
      %p280 = scmp.le.s32.totalorder 1, %s19
      %p281 = scmp.lt.s32.totalorder %s19, 3
      %p282 = pnand %p280, %p281
      %p283 = pneg %p282
      // Predicated region
      $region53: #{tpu_custom_call.1} parent=5 // pred_check
        _
      $region54: #{tpu_custom_call.1} parent=5 // pred_check_branch
        %285 = sbr.rel (%p282) target = $region56
      $region55: #{tpu_custom_call.1} parent=5 // pred_region
        %s286 = ssub.s32 %s19, 1
        %p287 = pneg %p40
        %p288 = pneg %p37
        %p289 = pneg %p61
        %p290 = pneg %p58
        %p291 = pneg %p82
        %p292 = pneg %p79
        %p293 = pneg %p103
        %p294 = pneg %p100
        %p295 = pneg %p124
        %p296 = pneg %p121
        %p297 = pneg %p145
        %p298 = pneg %p142
        %p299 = pneg %p166
        %p300 = pneg %p163
        %p301 = pneg %p187
        %p302 = pneg %p184
        %p303 = pneg %p208
        %p304 = pneg %p205
        %p305 = pneg %p234
        %p306 = pneg %p231
        %s307 = sand.u32 %s221, 1
        %s308 = scalar_lea.sflag [#allocation4], %s307
        %s309 = sand.u32 %s221, 1
        %s310 = scalar_lea.vmem [#allocation3], %s309
        %s312 = smul.u32 %s24, 128
        %s313 = sshra.s32 %s312, 7
        %s314 = sand.u32 %s312, 127
        %s315 = smul.addr %s313, 4
        %s316 = scalar_lea.vmem %s0, %s315
        %v317 = vld [vmem:[%s316] sm:$0x7]
        %v318 = vpack.c.bf16 %v317, %v317
        %v319 = vld [vmem:[%s1] sm:$0xf]
        %v320 = vld [vmem:[%s1 + $0x4] sm:$0xf]
        %v321 = vld [vmem:[%s1 + $0x8] sm:$0xf]
        %v322 = vld [vmem:[%s1 + $0xc] sm:$0xf]
        %v323 = vld [vmem:[%s1 + $0x10] sm:$0xf]
        %v324 = vld [vmem:[%s1 + $0x14] sm:$0xf]
        %v325 = vld [vmem:[%s1 + $0x18] sm:$0xf]
        %v326 = vld [vmem:[%s1 + $0x1c] sm:$0xf]
        %v327 = vld [vmem:[%s1 + $0x20] sm:$0xf]
        %v328 = vld [vmem:[%s1 + $0x24] sm:$0xf]
        %v329 = vld [vmem:[%s1 + $0x28] sm:$0xf]
        %v330 = vld [vmem:[%s1 + $0x2c] sm:$0xf]
        %v331 = vld [vmem:[%s1 + $0x30] sm:$0xf]
        %v332 = vld [vmem:[%s1 + $0x34] sm:$0xf]
        %v333 = vld [vmem:[%s1 + $0x38] sm:$0xf]
        %v334 = vld [vmem:[%s1 + $0x3c] sm:$0xf]
        %v335 = vld [vmem:[%s1 + $0x40] sm:$0xf]
        %v336 = vld [vmem:[%s1 + $0x44] sm:$0xf]
        %v337 = vld [vmem:[%s1 + $0x48] sm:$0xf]
        %v338 = vld [vmem:[%s1 + $0x4c] sm:$0xf]
        %v339 = vld [vmem:[%s1 + $0x50] sm:$0xf]
        %v340 = vld [vmem:[%s1 + $0x54] sm:$0xf]
        %v341 = vld [vmem:[%s1 + $0x58] sm:$0xf]
        %v342 = vld [vmem:[%s1 + $0x5c] sm:$0xf]
        %v343 = vld [vmem:[%s1 + $0x60] sm:$0xf]
        %v344 = vld [vmem:[%s1 + $0x64] sm:$0xf]
        %v345 = vld [vmem:[%s1 + $0x68] sm:$0xf]
        %v346 = vld [vmem:[%s1 + $0x6c] sm:$0xf]
        %v347 = vld [vmem:[%s1 + $0x70] sm:$0xf]
        %v348 = vld [vmem:[%s1 + $0x74] sm:$0xf]
        %v349 = vld [vmem:[%s1 + $0x78] sm:$0xf]
        %v350 = vld [vmem:[%s1 + $0x7c] sm:$0xf]
        %v351 = vld [vmem:[%s1 + $0x80] sm:$0xf]
        %v352 = vld [vmem:[%s1 + $0x84] sm:$0xf]
        %v353 = vld [vmem:[%s1 + $0x88] sm:$0xf]
        %v354 = vld [vmem:[%s1 + $0x8c] sm:$0xf]
        %v355 = vld [vmem:[%s1 + $0x90] sm:$0xf]
        %v356 = vld [vmem:[%s1 + $0x94] sm:$0xf]
        %v357 = vld [vmem:[%s1 + $0x98] sm:$0xf]
        %v358 = vld [vmem:[%s1 + $0x9c] sm:$0xf]
        %v359 = vld [vmem:[%s1 + $0xa0] sm:$0xf]
        %v360 = vld [vmem:[%s1 + $0xa4] sm:$0xf]
        %v361 = vld [vmem:[%s1 + $0xa8] sm:$0xf]
        %v362 = vld [vmem:[%s1 + $0xac] sm:$0xf]
        %v363 = vld [vmem:[%s1 + $0xb0] sm:$0xf]
        %v364 = vld [vmem:[%s1 + $0xb4] sm:$0xf]
        %v365 = vld [vmem:[%s1 + $0xb8] sm:$0xf]
        %v366 = vld [vmem:[%s1 + $0xbc] sm:$0xf]
        %v367 = vld [vmem:[%s1 + $0xc0] sm:$0xf]
        %v368 = vld [vmem:[%s1 + $0xc4] sm:$0xf]
        %v369 = vld [vmem:[%s1 + $0xc8] sm:$0xf]
        %v370 = vld [vmem:[%s1 + $0xcc] sm:$0xf]
        %v371 = vld [vmem:[%s1 + $0xd0] sm:$0xf]
        %v372 = vld [vmem:[%s1 + $0xd4] sm:$0xf]
        %v373 = vld [vmem:[%s1 + $0xd8] sm:$0xf]
        %v374 = vld [vmem:[%s1 + $0xdc] sm:$0xf]
        %v375 = vld [vmem:[%s1 + $0xe0] sm:$0xf]
        %v376 = vld [vmem:[%s1 + $0xe4] sm:$0xf]
        %v377 = vld [vmem:[%s1 + $0xe8] sm:$0xf]
        %v378 = vld [vmem:[%s1 + $0xec] sm:$0xf]
        %v379 = vld [vmem:[%s1 + $0xf0] sm:$0xf]
        %v380 = vld [vmem:[%s1 + $0xf4] sm:$0xf]
        %v381 = vld [vmem:[%s1 + $0xf8] sm:$0xf]
        %v382 = vld [vmem:[%s1 + $0xfc] sm:$0xf]
        %v383 = vld [vmem:[%s2] sm:$0xff]
        %v384 = vld [vmem:[%s2 + $0x8] sm:$0xff]
        %v385 = vld [vmem:[%s2 + $0x10] sm:$0xff]
        %v386 = vld [vmem:[%s2 + $0x18] sm:$0xff]
        %v387 = vld [vmem:[%s2 + $0x20] sm:$0xff]
        %v388 = vld [vmem:[%s2 + $0x28] sm:$0xff]
        %v389 = vld [vmem:[%s2 + $0x30] sm:$0xff]
        %v390 = vld [vmem:[%s2 + $0x38] sm:$0xff]
        %v391 = vld [vmem:[%s2 + $0x40] sm:$0xff]
        %v392 = vld [vmem:[%s2 + $0x48] sm:$0xff]
        %v393 = vld [vmem:[%s2 + $0x50] sm:$0xff]
        %v394 = vld [vmem:[%s2 + $0x58] sm:$0xff]
        %v395 = vld [vmem:[%s2 + $0x60] sm:$0xff]
        %v396 = vld [vmem:[%s2 + $0x68] sm:$0xff]
        %v397 = vld [vmem:[%s2 + $0x70] sm:$0xff]
        %v398 = vld [vmem:[%s2 + $0x78] sm:$0xff]
        %v399 = vld [vmem:[%s2 + $0x80] sm:$0xff]
        %v400 = vld [vmem:[%s2 + $0x88] sm:$0xff]
        %v401 = vld [vmem:[%s2 + $0x90] sm:$0xff]
        %v402 = vld [vmem:[%s2 + $0x98] sm:$0xff]
        %v403 = vld [vmem:[%s2 + $0xa0] sm:$0xff]
        %v404 = vld [vmem:[%s2 + $0xa8] sm:$0xff]
        %v405 = vld [vmem:[%s2 + $0xb0] sm:$0xff]
        %v406 = vld [vmem:[%s2 + $0xb8] sm:$0xff]
        %v407 = vld [vmem:[%s2 + $0xc0] sm:$0xff]
        %v408 = vld [vmem:[%s2 + $0xc8] sm:$0xff]
        %v409 = vld [vmem:[%s2 + $0xd0] sm:$0xff]
        %v410 = vld [vmem:[%s2 + $0xd8] sm:$0xff]
        %v411 = vld [vmem:[%s2 + $0xe0] sm:$0xff]
        %v412 = vld [vmem:[%s2 + $0xe8] sm:$0xff]
        %v413 = vld [vmem:[%s2 + $0xf0] sm:$0xff]
        %v414 = vld [vmem:[%s2 + $0xf8] sm:$0xff]
        %v415 = vld [vmem:[%s2 + $0x100] sm:$0xff]
        %v416 = vld [vmem:[%s2 + $0x108] sm:$0xff]
        %v417 = vld [vmem:[%s2 + $0x110] sm:$0xff]
        %v418 = vld [vmem:[%s2 + $0x118] sm:$0xff]
        %v419 = vld [vmem:[%s2 + $0x120] sm:$0xff]
        %v420 = vld [vmem:[%s2 + $0x128] sm:$0xff]
        %v421 = vld [vmem:[%s2 + $0x130] sm:$0xff]
        %v422 = vld [vmem:[%s2 + $0x138] sm:$0xff]
        %v423 = vld [vmem:[%s2 + $0x140] sm:$0xff]
        %v424 = vld [vmem:[%s2 + $0x148] sm:$0xff]
        %v425 = vld [vmem:[%s2 + $0x150] sm:$0xff]
        %v426 = vld [vmem:[%s2 + $0x158] sm:$0xff]
        %v427 = vld [vmem:[%s2 + $0x160] sm:$0xff]
        %v428 = vld [vmem:[%s2 + $0x168] sm:$0xff]
        %v429 = vld [vmem:[%s2 + $0x170] sm:$0xff]
        %v430 = vld [vmem:[%s2 + $0x178] sm:$0xff]
        %v431 = vld [vmem:[%s2 + $0x180] sm:$0xff]
        %v432 = vld [vmem:[%s2 + $0x188] sm:$0xff]
        %v433 = vld [vmem:[%s2 + $0x190] sm:$0xff]
        %v434 = vld [vmem:[%s2 + $0x198] sm:$0xff]
        %v435 = vld [vmem:[%s2 + $0x1a0] sm:$0xff]
        %v436 = vld [vmem:[%s2 + $0x1a8] sm:$0xff]
        %v437 = vld [vmem:[%s2 + $0x1b0] sm:$0xff]
        %v438 = vld [vmem:[%s2 + $0x1b8] sm:$0xff]
        %v439 = vld [vmem:[%s2 + $0x1c0] sm:$0xff]
        %v440 = vld [vmem:[%s2 + $0x1c8] sm:$0xff]
        %v441 = vld [vmem:[%s2 + $0x1d0] sm:$0xff]
        %v442 = vld [vmem:[%s2 + $0x1d8] sm:$0xff]
        %v443 = vld [vmem:[%s2 + $0x1e0] sm:$0xff]
        %v444 = vld [vmem:[%s2 + $0x1e8] sm:$0xff]
        %v445 = vld [vmem:[%s2 + $0x1f0] sm:$0xff]
        %v446 = vld [vmem:[%s2 + $0x1f8] sm:$0xff]
        %448 = vset.pattern.permute.xlu0 0
        %449 = vperm.xlu0 %448, %v383
        %v450 = vpop.permute.xlu0 %449
        %453 = vset.pattern.permute.xlu0 0
        %454 = vperm.xlu0 %453, %v384
        %v455 = vpop.permute.xlu0 %454
        %458 = vset.pattern.permute.xlu0 0
        %459 = vperm.xlu0 %458, %v385
        %v460 = vpop.permute.xlu0 %459
        %463 = vset.pattern.permute.xlu0 0
        %464 = vperm.xlu0 %463, %v386
        %v465 = vpop.permute.xlu0 %464
        %468 = vset.pattern.permute.xlu0 0
        %469 = vperm.xlu0 %468, %v387
        %v470 = vpop.permute.xlu0 %469
        %473 = vset.pattern.permute.xlu0 0
        %474 = vperm.xlu0 %473, %v388
        %v475 = vpop.permute.xlu0 %474
        %478 = vset.pattern.permute.xlu0 0
        %479 = vperm.xlu0 %478, %v389
        %v480 = vpop.permute.xlu0 %479
        %483 = vset.pattern.permute.xlu0 0
        %484 = vperm.xlu0 %483, %v390
        %v485 = vpop.permute.xlu0 %484
        %488 = vset.pattern.permute.xlu0 0
        %489 = vperm.xlu0 %488, %v391
        %v490 = vpop.permute.xlu0 %489
        %493 = vset.pattern.permute.xlu0 0
        %494 = vperm.xlu0 %493, %v392
        %v495 = vpop.permute.xlu0 %494
        %498 = vset.pattern.permute.xlu0 0
        %499 = vperm.xlu0 %498, %v393
        %v500 = vpop.permute.xlu0 %499
        %503 = vset.pattern.permute.xlu0 0
        %504 = vperm.xlu0 %503, %v394
        %v505 = vpop.permute.xlu0 %504
        %508 = vset.pattern.permute.xlu0 0
        %509 = vperm.xlu0 %508, %v395
        %v510 = vpop.permute.xlu0 %509
        %513 = vset.pattern.permute.xlu0 0
        %514 = vperm.xlu0 %513, %v396
        %v515 = vpop.permute.xlu0 %514
        %518 = vset.pattern.permute.xlu0 0
        %519 = vperm.xlu0 %518, %v397
        %v520 = vpop.permute.xlu0 %519
        %523 = vset.pattern.permute.xlu0 0
        %524 = vperm.xlu0 %523, %v398
        %v525 = vpop.permute.xlu0 %524
        %528 = vset.pattern.permute.xlu0 0
        %529 = vperm.xlu0 %528, %v399
        %v530 = vpop.permute.xlu0 %529
        %533 = vset.pattern.permute.xlu0 0
        %534 = vperm.xlu0 %533, %v400
        %v535 = vpop.permute.xlu0 %534
        %538 = vset.pattern.permute.xlu0 0
        %539 = vperm.xlu0 %538, %v401
        %v540 = vpop.permute.xlu0 %539
        %543 = vset.pattern.permute.xlu0 0
        %544 = vperm.xlu0 %543, %v402
        %v545 = vpop.permute.xlu0 %544
        %548 = vset.pattern.permute.xlu0 0
        %549 = vperm.xlu0 %548, %v403
        %v550 = vpop.permute.xlu0 %549
        %553 = vset.pattern.permute.xlu0 0
        %554 = vperm.xlu0 %553, %v404
        %v555 = vpop.permute.xlu0 %554
        %558 = vset.pattern.permute.xlu0 0
        %559 = vperm.xlu0 %558, %v405
        %v560 = vpop.permute.xlu0 %559
        %563 = vset.pattern.permute.xlu0 0
        %564 = vperm.xlu0 %563, %v406
        %v565 = vpop.permute.xlu0 %564
        %568 = vset.pattern.permute.xlu0 0
        %569 = vperm.xlu0 %568, %v407
        %v570 = vpop.permute.xlu0 %569
        %573 = vset.pattern.permute.xlu0 0
        %574 = vperm.xlu0 %573, %v408
        %v575 = vpop.permute.xlu0 %574
        %578 = vset.pattern.permute.xlu0 0
        %579 = vperm.xlu0 %578, %v409
        %v580 = vpop.permute.xlu0 %579
        %583 = vset.pattern.permute.xlu0 0
        %584 = vperm.xlu0 %583, %v410
        %v585 = vpop.permute.xlu0 %584
        %588 = vset.pattern.permute.xlu0 0
        %589 = vperm.xlu0 %588, %v411
        %v590 = vpop.permute.xlu0 %589
        %593 = vset.pattern.permute.xlu0 0
        %594 = vperm.xlu0 %593, %v412
        %v595 = vpop.permute.xlu0 %594
        %598 = vset.pattern.permute.xlu0 0
        %599 = vperm.xlu0 %598, %v413
        %v600 = vpop.permute.xlu0 %599
        %603 = vset.pattern.permute.xlu0 0
        %604 = vperm.xlu0 %603, %v414
        %v605 = vpop.permute.xlu0 %604
        %608 = vset.pattern.permute.xlu0 0
        %609 = vperm.xlu0 %608, %v415
        %v610 = vpop.permute.xlu0 %609
        %613 = vset.pattern.permute.xlu0 0
        %614 = vperm.xlu0 %613, %v416
        %v615 = vpop.permute.xlu0 %614
        %618 = vset.pattern.permute.xlu0 0
        %619 = vperm.xlu0 %618, %v417
        %v620 = vpop.permute.xlu0 %619
        %623 = vset.pattern.permute.xlu0 0
        %624 = vperm.xlu0 %623, %v418
        %v625 = vpop.permute.xlu0 %624
        %628 = vset.pattern.permute.xlu0 0
        %629 = vperm.xlu0 %628, %v419
        %v630 = vpop.permute.xlu0 %629
        %633 = vset.pattern.permute.xlu0 0
        %634 = vperm.xlu0 %633, %v420
        %v635 = vpop.permute.xlu0 %634
        %638 = vset.pattern.permute.xlu0 0
        %639 = vperm.xlu0 %638, %v421
        %v640 = vpop.permute.xlu0 %639
        %643 = vset.pattern.permute.xlu0 0
        %644 = vperm.xlu0 %643, %v422
        %v645 = vpop.permute.xlu0 %644
        %648 = vset.pattern.permute.xlu0 0
        %649 = vperm.xlu0 %648, %v423
        %v650 = vpop.permute.xlu0 %649
        %653 = vset.pattern.permute.xlu0 0
        %654 = vperm.xlu0 %653, %v424
        %v655 = vpop.permute.xlu0 %654
        %658 = vset.pattern.permute.xlu0 0
        %659 = vperm.xlu0 %658, %v425
        %v660 = vpop.permute.xlu0 %659
        %663 = vset.pattern.permute.xlu0 0
        %664 = vperm.xlu0 %663, %v426
        %v665 = vpop.permute.xlu0 %664
        %668 = vset.pattern.permute.xlu0 0
        %669 = vperm.xlu0 %668, %v427
        %v670 = vpop.permute.xlu0 %669
        %673 = vset.pattern.permute.xlu0 0
        %674 = vperm.xlu0 %673, %v428
        %v675 = vpop.permute.xlu0 %674
        %678 = vset.pattern.permute.xlu0 0
        %679 = vperm.xlu0 %678, %v429
        %v680 = vpop.permute.xlu0 %679
        %683 = vset.pattern.permute.xlu0 0
        %684 = vperm.xlu0 %683, %v430
        %v685 = vpop.permute.xlu0 %684
        %688 = vset.pattern.permute.xlu0 0
        %689 = vperm.xlu0 %688, %v431
        %v690 = vpop.permute.xlu0 %689
        %693 = vset.pattern.permute.xlu0 0
        %694 = vperm.xlu0 %693, %v432
        %v695 = vpop.permute.xlu0 %694
        %698 = vset.pattern.permute.xlu0 0
        %699 = vperm.xlu0 %698, %v433
        %v700 = vpop.permute.xlu0 %699
        %703 = vset.pattern.permute.xlu0 0
        %704 = vperm.xlu0 %703, %v434
        %v705 = vpop.permute.xlu0 %704
        %708 = vset.pattern.permute.xlu0 0
        %709 = vperm.xlu0 %708, %v435
        %v710 = vpop.permute.xlu0 %709
        %713 = vset.pattern.permute.xlu0 0
        %714 = vperm.xlu0 %713, %v436
        %v715 = vpop.permute.xlu0 %714
        %718 = vset.pattern.permute.xlu0 0
        %719 = vperm.xlu0 %718, %v437
        %v720 = vpop.permute.xlu0 %719
        %723 = vset.pattern.permute.xlu0 0
        %724 = vperm.xlu0 %723, %v438
        %v725 = vpop.permute.xlu0 %724
        %728 = vset.pattern.permute.xlu0 0
        %729 = vperm.xlu0 %728, %v439
        %v730 = vpop.permute.xlu0 %729
        %733 = vset.pattern.permute.xlu0 0
        %734 = vperm.xlu0 %733, %v440
        %v735 = vpop.permute.xlu0 %734
        %738 = vset.pattern.permute.xlu0 0
        %739 = vperm.xlu0 %738, %v441
        %v740 = vpop.permute.xlu0 %739
        %743 = vset.pattern.permute.xlu0 0
        %744 = vperm.xlu0 %743, %v442
        %v745 = vpop.permute.xlu0 %744
        %748 = vset.pattern.permute.xlu0 0
        %749 = vperm.xlu0 %748, %v443
        %v750 = vpop.permute.xlu0 %749
        %753 = vset.pattern.permute.xlu0 0
        %754 = vperm.xlu0 %753, %v444
        %v755 = vpop.permute.xlu0 %754
        %758 = vset.pattern.permute.xlu0 0
        %759 = vperm.xlu0 %758, %v445
        %v760 = vpop.permute.xlu0 %759
        %763 = vset.pattern.permute.xlu0 0
        %764 = vperm.xlu0 %763, %v446
        %v765 = vpop.permute.xlu0 %764
        %v831 = vunpack.c.l.b16 %v319
        %v832 = vunpack.c.l.b16 %v320
        %v833 = vunpack.c.l.b16 %v321
        %v834 = vunpack.c.l.b16 %v322
        %v835 = vunpack.c.l.b16 %v323
        %v836 = vunpack.c.l.b16 %v324
        %v837 = vunpack.c.l.b16 %v325
        %v838 = vunpack.c.l.b16 %v326
        %v839 = vunpack.c.l.b16 %v327
        %v840 = vunpack.c.l.b16 %v328
        %v841 = vunpack.c.l.b16 %v329
        %v842 = vunpack.c.l.b16 %v330
        %v843 = vunpack.c.l.b16 %v331
        %v844 = vunpack.c.l.b16 %v332
        %v845 = vunpack.c.l.b16 %v333
        %v846 = vunpack.c.l.b16 %v334
        %v847 = vunpack.c.l.b16 %v335
        %v848 = vunpack.c.l.b16 %v336
        %v849 = vunpack.c.l.b16 %v337
        %v850 = vunpack.c.l.b16 %v338
        %v851 = vunpack.c.l.b16 %v339
        %v852 = vunpack.c.l.b16 %v340
        %v853 = vunpack.c.l.b16 %v341
        %v854 = vunpack.c.l.b16 %v342
        %v855 = vunpack.c.l.b16 %v343
        %v856 = vunpack.c.l.b16 %v344
        %v857 = vunpack.c.l.b16 %v345
        %v858 = vunpack.c.l.b16 %v346
        %v859 = vunpack.c.l.b16 %v347
        %v860 = vunpack.c.l.b16 %v348
        %v861 = vunpack.c.l.b16 %v349
        %v862 = vunpack.c.l.b16 %v350
        %v863 = vunpack.c.l.b16 %v351
        %v864 = vunpack.c.l.b16 %v352
        %v865 = vunpack.c.l.b16 %v353
        %v866 = vunpack.c.l.b16 %v354
        %v867 = vunpack.c.l.b16 %v355
        %v868 = vunpack.c.l.b16 %v356
        %v869 = vunpack.c.l.b16 %v357
        %v870 = vunpack.c.l.b16 %v358
        %v871 = vunpack.c.l.b16 %v359
        %v872 = vunpack.c.l.b16 %v360
        %v873 = vunpack.c.l.b16 %v361
        %v874 = vunpack.c.l.b16 %v362
        %v875 = vunpack.c.l.b16 %v363
        %v876 = vunpack.c.l.b16 %v364
        %v877 = vunpack.c.l.b16 %v365
        %v878 = vunpack.c.l.b16 %v366
        %v879 = vunpack.c.l.b16 %v367
        %v880 = vunpack.c.l.b16 %v368
        %v881 = vunpack.c.l.b16 %v369
        %v882 = vunpack.c.l.b16 %v370
        %v883 = vunpack.c.l.b16 %v371
        %v884 = vunpack.c.l.b16 %v372
        %v885 = vunpack.c.l.b16 %v373
        %v886 = vunpack.c.l.b16 %v374
        %v887 = vunpack.c.l.b16 %v375
        %v888 = vunpack.c.l.b16 %v376
        %v889 = vunpack.c.l.b16 %v377
        %v890 = vunpack.c.l.b16 %v378
        %v891 = vunpack.c.l.b16 %v379
        %v892 = vunpack.c.l.b16 %v380
        %v893 = vunpack.c.l.b16 %v381
        %v894 = vunpack.c.l.b16 %v382
        %v895 = vpack.c.b16 %v832, %v831
        %v896 = vpack.c.b16 %v834, %v833
        %v897 = vpack.c.b16 %v836, %v835
        %v898 = vpack.c.b16 %v838, %v837
        %v899 = vpack.c.b16 %v840, %v839
        %v900 = vpack.c.b16 %v842, %v841
        %v901 = vpack.c.b16 %v844, %v843
        %v902 = vpack.c.b16 %v846, %v845
        %v903 = vpack.c.b16 %v848, %v847
        %v904 = vpack.c.b16 %v850, %v849
        %v905 = vpack.c.b16 %v852, %v851
        %v906 = vpack.c.b16 %v854, %v853
        %v907 = vpack.c.b16 %v856, %v855
        %v908 = vpack.c.b16 %v858, %v857
        %v909 = vpack.c.b16 %v860, %v859
        %v910 = vpack.c.b16 %v862, %v861
        %v911 = vpack.c.b16 %v864, %v863
        %v912 = vpack.c.b16 %v866, %v865
        %v913 = vpack.c.b16 %v868, %v867
        %v914 = vpack.c.b16 %v870, %v869
        %v915 = vpack.c.b16 %v872, %v871
        %v916 = vpack.c.b16 %v874, %v873
        %v917 = vpack.c.b16 %v876, %v875
        %v918 = vpack.c.b16 %v878, %v877
        %v919 = vpack.c.b16 %v880, %v879
        %v920 = vpack.c.b16 %v882, %v881
        %v921 = vpack.c.b16 %v884, %v883
        %v922 = vpack.c.b16 %v886, %v885
        %v923 = vpack.c.b16 %v888, %v887
        %v924 = vpack.c.b16 %v890, %v889
        %v925 = vpack.c.b16 %v892, %v891
        %v926 = vpack.c.b16 %v894, %v893
        %vm927 = vcmask 23552
        %v929 = vsel %vm927, %v895, 0
        %v932 = vsel %vm927, %v896, 0
        %v935 = vsel %vm927, %v897, 0
        %v938 = vsel %vm927, %v898, 0
        %v941 = vsel %vm927, %v899, 0
        %v944 = vsel %vm927, %v900, 0
        %v947 = vsel %vm927, %v901, 0
        %v950 = vsel %vm927, %v902, 0
        %v953 = vsel %vm927, %v903, 0
        %v956 = vsel %vm927, %v904, 0
        %v959 = vsel %vm927, %v905, 0
        %v962 = vsel %vm927, %v906, 0
        %v965 = vsel %vm927, %v907, 0
        %v968 = vsel %vm927, %v908, 0
        %v971 = vsel %vm927, %v909, 0
        %v974 = vsel %vm927, %v910, 0
        %v977 = vsel %vm927, %v911, 0
        %v980 = vsel %vm927, %v912, 0
        %v983 = vsel %vm927, %v913, 0
        %v986 = vsel %vm927, %v914, 0
        %v989 = vsel %vm927, %v915, 0
        %v992 = vsel %vm927, %v916, 0
        %v995 = vsel %vm927, %v917, 0
        %v998 = vsel %vm927, %v918, 0
        %v1001 = vsel %vm927, %v919, 0
        %v1004 = vsel %vm927, %v920, 0
        %v1007 = vsel %vm927, %v921, 0
        %v1010 = vsel %vm927, %v922, 0
        %v1013 = vsel %vm927, %v923, 0
        %v1016 = vsel %vm927, %v924, 0
        %v1019 = vsel %vm927, %v925, 0
        %v1022 = vsel %vm927, %v926, 0
        %vm1024 = vcmask 1040384
        %vm1025 = vcmask 1041408
        %v1026 = vsel %vm1024, 4294967295, 65535
        %v1027 = vsel %vm1025, %v1026, 0
        %v1029 = vand.u32 %v318, %v1027
        %1031 = vmatpush.bf16.msra.mxu0 0
        %1032 = vmatpush.bf16.msra.mxu0 0
        %1033 = vmatpush.bf16.msra.mxu0 0
        %1034 = vmatpush.bf16.msra.mxu0 0
        %1035 = vmatpush.bf16.msra.mxu0 0
        %1036 = vmatpush.bf16.msra.mxu0 0
        %1037 = vmatpush.bf16.msra.mxu0 0
        %1038 = vmatpush.bf16.msra.mxu0 %v1029
        %1039 = vmatmul.bf16.gmra.mxu0 %v929
        %v1040 = vpop.f32.mrf.mxu0
        %v1041 = vadd.f32 %v450, %v1040
        %v1042 = vpop.f32.mrf.mxu0
        %v1043 = vadd.f32 %v455, %v1042
        %1044 = vmatmul.bf16.gmra.mxu0 %v932
        %v1045 = vpop.f32.mrf.mxu0
        %v1046 = vadd.f32 %v460, %v1045
        %v1047 = vpop.f32.mrf.mxu0
        %v1048 = vadd.f32 %v465, %v1047
        %1049 = vmatmul.bf16.gmra.mxu0 %v935
        %v1050 = vpop.f32.mrf.mxu0
        %v1051 = vadd.f32 %v470, %v1050
        %v1052 = vpop.f32.mrf.mxu0
        %v1053 = vadd.f32 %v475, %v1052
        %1054 = vmatmul.bf16.gmra.mxu0 %v938
        %v1055 = vpop.f32.mrf.mxu0
        %v1056 = vadd.f32 %v480, %v1055
        %v1057 = vpop.f32.mrf.mxu0
        %v1058 = vadd.f32 %v485, %v1057
        %1059 = vmatmul.bf16.gmra.mxu0 %v941
        %v1060 = vpop.f32.mrf.mxu0
        %v1061 = vadd.f32 %v490, %v1060
        %v1062 = vpop.f32.mrf.mxu0
        %v1063 = vadd.f32 %v495, %v1062
        %1064 = vmatmul.bf16.gmra.mxu0 %v944
        %v1065 = vpop.f32.mrf.mxu0
        %v1066 = vadd.f32 %v500, %v1065
        %v1067 = vpop.f32.mrf.mxu0
        %v1068 = vadd.f32 %v505, %v1067
        %1069 = vmatmul.bf16.gmra.mxu0 %v947
        %v1070 = vpop.f32.mrf.mxu0
        %v1071 = vadd.f32 %v510, %v1070
        %v1072 = vpop.f32.mrf.mxu0
        %v1073 = vadd.f32 %v515, %v1072
        %1074 = vmatmul.bf16.gmra.mxu0 %v950
        %v1075 = vpop.f32.mrf.mxu0
        %v1076 = vadd.f32 %v520, %v1075
        %v1077 = vpop.f32.mrf.mxu0
        %v1078 = vadd.f32 %v525, %v1077
        %1079 = vmatmul.bf16.gmra.mxu0 %v953
        %v1080 = vpop.f32.mrf.mxu0
        %v1081 = vadd.f32 %v530, %v1080
        %v1082 = vpop.f32.mrf.mxu0
        %v1083 = vadd.f32 %v535, %v1082
        %1084 = vmatmul.bf16.gmra.mxu0 %v956
        %v1085 = vpop.f32.mrf.mxu0
        %v1086 = vadd.f32 %v540, %v1085
        %v1087 = vpop.f32.mrf.mxu0
        %v1088 = vadd.f32 %v545, %v1087
        %1089 = vmatmul.bf16.gmra.mxu0 %v959
        %v1090 = vpop.f32.mrf.mxu0
        %v1091 = vadd.f32 %v550, %v1090
        %v1092 = vpop.f32.mrf.mxu0
        %v1093 = vadd.f32 %v555, %v1092
        %1094 = vmatmul.bf16.gmra.mxu0 %v962
        %v1095 = vpop.f32.mrf.mxu0
        %v1096 = vadd.f32 %v560, %v1095
        %v1097 = vpop.f32.mrf.mxu0
        %v1098 = vadd.f32 %v565, %v1097
        %1099 = vmatmul.bf16.gmra.mxu0 %v965
        %v1100 = vpop.f32.mrf.mxu0
        %v1101 = vadd.f32 %v570, %v1100
        %v1102 = vpop.f32.mrf.mxu0
        %v1103 = vadd.f32 %v575, %v1102
        %1104 = vmatmul.bf16.gmra.mxu0 %v968
        %v1105 = vpop.f32.mrf.mxu0
        %v1106 = vadd.f32 %v580, %v1105
        %v1107 = vpop.f32.mrf.mxu0
        %v1108 = vadd.f32 %v585, %v1107
        %1109 = vmatmul.bf16.gmra.mxu0 %v971
        %v1110 = vpop.f32.mrf.mxu0
        %v1111 = vadd.f32 %v590, %v1110
        %v1112 = vpop.f32.mrf.mxu0
        %v1113 = vadd.f32 %v595, %v1112
        %1114 = vmatmul.bf16.gmra.mxu0 %v974
        %v1115 = vpop.f32.mrf.mxu0
        %v1116 = vadd.f32 %v600, %v1115
        %v1117 = vpop.f32.mrf.mxu0
        %v1118 = vadd.f32 %v605, %v1117
        %1119 = vmatmul.bf16.gmra.mxu0 %v977
        %v1120 = vpop.f32.mrf.mxu0
        %v1121 = vadd.f32 %v610, %v1120
        %v1122 = vpop.f32.mrf.mxu0
        %v1123 = vadd.f32 %v615, %v1122
        %1124 = vmatmul.bf16.gmra.mxu0 %v980
        %v1125 = vpop.f32.mrf.mxu0
        %v1126 = vadd.f32 %v620, %v1125
        %v1127 = vpop.f32.mrf.mxu0
        %v1128 = vadd.f32 %v625, %v1127
        %1129 = vmatmul.bf16.gmra.mxu0 %v983
        %v1130 = vpop.f32.mrf.mxu0
        %v1131 = vadd.f32 %v630, %v1130
        %v1132 = vpop.f32.mrf.mxu0
        %v1133 = vadd.f32 %v635, %v1132
        %1134 = vmatmul.bf16.gmra.mxu0 %v986
        %v1135 = vpop.f32.mrf.mxu0
        %v1136 = vadd.f32 %v640, %v1135
        %v1137 = vpop.f32.mrf.mxu0
        %v1138 = vadd.f32 %v645, %v1137
        %1139 = vmatmul.bf16.gmra.mxu0 %v989
        %v1140 = vpop.f32.mrf.mxu0
        %v1141 = vadd.f32 %v650, %v1140
        %v1142 = vpop.f32.mrf.mxu0
        %v1143 = vadd.f32 %v655, %v1142
        %1144 = vmatmul.bf16.gmra.mxu0 %v992
        %v1145 = vpop.f32.mrf.mxu0
        %v1146 = vadd.f32 %v660, %v1145
        %v1147 = vpop.f32.mrf.mxu0
        %v1148 = vadd.f32 %v665, %v1147
        %1149 = vmatmul.bf16.gmra.mxu0 %v995
        %v1150 = vpop.f32.mrf.mxu0
        %v1151 = vadd.f32 %v670, %v1150
        %v1152 = vpop.f32.mrf.mxu0
        %v1153 = vadd.f32 %v675, %v1152
        %1154 = vmatmul.bf16.gmra.mxu0 %v998
        %v1155 = vpop.f32.mrf.mxu0
        %v1156 = vadd.f32 %v680, %v1155
        %v1157 = vpop.f32.mrf.mxu0
        %v1158 = vadd.f32 %v685, %v1157
        %1159 = vmatmul.bf16.gmra.mxu0 %v1001
        %v1160 = vpop.f32.mrf.mxu0
        %v1161 = vadd.f32 %v690, %v1160
        %v1162 = vpop.f32.mrf.mxu0
        %v1163 = vadd.f32 %v695, %v1162
        %1164 = vmatmul.bf16.gmra.mxu0 %v1004
        %v1165 = vpop.f32.mrf.mxu0
        %v1166 = vadd.f32 %v700, %v1165
        %v1167 = vpop.f32.mrf.mxu0
        %v1168 = vadd.f32 %v705, %v1167
        %1169 = vmatmul.bf16.gmra.mxu0 %v1007
        %v1170 = vpop.f32.mrf.mxu0
        %v1171 = vadd.f32 %v710, %v1170
        %v1172 = vpop.f32.mrf.mxu0
        %v1173 = vadd.f32 %v715, %v1172
        %1174 = vmatmul.bf16.gmra.mxu0 %v1010
        %v1175 = vpop.f32.mrf.mxu0
        %v1176 = vadd.f32 %v720, %v1175
        %v1177 = vpop.f32.mrf.mxu0
        %v1178 = vadd.f32 %v725, %v1177
        %1179 = vmatmul.bf16.gmra.mxu0 %v1013
        %v1180 = vpop.f32.mrf.mxu0
        %v1181 = vadd.f32 %v730, %v1180
        %v1182 = vpop.f32.mrf.mxu0
        %v1183 = vadd.f32 %v735, %v1182
        %1184 = vmatmul.bf16.gmra.mxu0 %v1016
        %v1185 = vpop.f32.mrf.mxu0
        %v1186 = vadd.f32 %v740, %v1185
        %v1187 = vpop.f32.mrf.mxu0
        %v1188 = vadd.f32 %v745, %v1187
        %1189 = vmatmul.bf16.gmra.mxu0 %v1019
        %v1190 = vpop.f32.mrf.mxu0
        %v1191 = vadd.f32 %v750, %v1190
        %v1192 = vpop.f32.mrf.mxu0
        %v1193 = vadd.f32 %v755, %v1192
        %1194 = vmatmul.bf16.gmra.mxu0 %v1022
        %v1195 = vpop.f32.mrf.mxu0
        %v1196 = vadd.f32 %v760, %v1195
        %v1197 = vpop.f32.mrf.mxu0
        %v1198 = vadd.f32 %v765, %v1197
        %1199 = vdwg.mxu0
        %v1200 = vmax.f32 %v1041, 0.0
        %v1201 = vmax.f32 %v1043, 0.0
        %v1202 = vmax.f32 %v1046, 0.0
        %v1203 = vmax.f32 %v1048, 0.0
        %v1204 = vmax.f32 %v1051, 0.0
        %v1205 = vmax.f32 %v1053, 0.0
        %v1206 = vmax.f32 %v1056, 0.0
        %v1207 = vmax.f32 %v1058, 0.0
        %v1208 = vmax.f32 %v1061, 0.0
        %v1209 = vmax.f32 %v1063, 0.0
        %v1210 = vmax.f32 %v1066, 0.0
        %v1211 = vmax.f32 %v1068, 0.0
        %v1212 = vmax.f32 %v1071, 0.0
        %v1213 = vmax.f32 %v1073, 0.0
        %v1214 = vmax.f32 %v1076, 0.0
        %v1215 = vmax.f32 %v1078, 0.0
        %v1216 = vmax.f32 %v1081, 0.0
        %v1217 = vmax.f32 %v1083, 0.0
        %v1218 = vmax.f32 %v1086, 0.0
        %v1219 = vmax.f32 %v1088, 0.0
        %v1220 = vmax.f32 %v1091, 0.0
        %v1221 = vmax.f32 %v1093, 0.0
        %v1222 = vmax.f32 %v1096, 0.0
        %v1223 = vmax.f32 %v1098, 0.0
        %v1224 = vmax.f32 %v1101, 0.0
        %v1225 = vmax.f32 %v1103, 0.0
        %v1226 = vmax.f32 %v1106, 0.0
        %v1227 = vmax.f32 %v1108, 0.0
        %v1228 = vmax.f32 %v1111, 0.0
        %v1229 = vmax.f32 %v1113, 0.0
        %v1230 = vmax.f32 %v1116, 0.0
        %v1231 = vmax.f32 %v1118, 0.0
        %v1232 = vmax.f32 %v1121, 0.0
        %v1233 = vmax.f32 %v1123, 0.0
        %v1234 = vmax.f32 %v1126, 0.0
        %v1235 = vmax.f32 %v1128, 0.0
        %v1236 = vmax.f32 %v1131, 0.0
        %v1237 = vmax.f32 %v1133, 0.0
        %v1238 = vmax.f32 %v1136, 0.0
        %v1239 = vmax.f32 %v1138, 0.0
        %v1240 = vmax.f32 %v1141, 0.0
        %v1241 = vmax.f32 %v1143, 0.0
        %v1242 = vmax.f32 %v1146, 0.0
        %v1243 = vmax.f32 %v1148, 0.0
        %v1244 = vmax.f32 %v1151, 0.0
        %v1245 = vmax.f32 %v1153, 0.0
        %v1246 = vmax.f32 %v1156, 0.0
        %v1247 = vmax.f32 %v1158, 0.0
        %v1248 = vmax.f32 %v1161, 0.0
        %v1249 = vmax.f32 %v1163, 0.0
        %v1250 = vmax.f32 %v1166, 0.0
        %v1251 = vmax.f32 %v1168, 0.0
        %v1252 = vmax.f32 %v1171, 0.0
        %v1253 = vmax.f32 %v1173, 0.0
        %v1254 = vmax.f32 %v1176, 0.0
        %v1255 = vmax.f32 %v1178, 0.0
        %v1256 = vmax.f32 %v1181, 0.0
        %v1257 = vmax.f32 %v1183, 0.0
        %v1258 = vmax.f32 %v1186, 0.0
        %v1259 = vmax.f32 %v1188, 0.0
        %v1260 = vmax.f32 %v1191, 0.0
        %v1261 = vmax.f32 %v1193, 0.0
        %v1262 = vmax.f32 %v1196, 0.0
        %v1263 = vmax.f32 %v1198, 0.0
        %v1264 = vpack.c.bf16 %v1201, %v1200
        %v1265 = vpack.c.bf16 %v1203, %v1202
        %v1266 = vpack.c.bf16 %v1205, %v1204
        %v1267 = vpack.c.bf16 %v1207, %v1206
        %v1268 = vpack.c.bf16 %v1209, %v1208
        %v1269 = vpack.c.bf16 %v1211, %v1210
        %v1270 = vpack.c.bf16 %v1213, %v1212
        %v1271 = vpack.c.bf16 %v1215, %v1214
        %v1272 = vpack.c.bf16 %v1217, %v1216
        %v1273 = vpack.c.bf16 %v1219, %v1218
        %v1274 = vpack.c.bf16 %v1221, %v1220
        %v1275 = vpack.c.bf16 %v1223, %v1222
        %v1276 = vpack.c.bf16 %v1225, %v1224
        %v1277 = vpack.c.bf16 %v1227, %v1226
        %v1278 = vpack.c.bf16 %v1229, %v1228
        %v1279 = vpack.c.bf16 %v1231, %v1230
        %v1280 = vpack.c.bf16 %v1233, %v1232
        %v1281 = vpack.c.bf16 %v1235, %v1234
        %v1282 = vpack.c.bf16 %v1237, %v1236
        %v1283 = vpack.c.bf16 %v1239, %v1238
        %v1284 = vpack.c.bf16 %v1241, %v1240
        %v1285 = vpack.c.bf16 %v1243, %v1242
        %v1286 = vpack.c.bf16 %v1245, %v1244
        %v1287 = vpack.c.bf16 %v1247, %v1246
        %v1288 = vpack.c.bf16 %v1249, %v1248
        %v1289 = vpack.c.bf16 %v1251, %v1250
        %v1290 = vpack.c.bf16 %v1253, %v1252
        %v1291 = vpack.c.bf16 %v1255, %v1254
        %v1292 = vpack.c.bf16 %v1257, %v1256
        %v1293 = vpack.c.bf16 %v1259, %v1258
        %v1294 = vpack.c.bf16 %v1261, %v1260
        %v1295 = vpack.c.bf16 %v1263, %v1262
        %v1296 = vld [vmem:[%s3] sm:$0xff]
        %v1297 = vld [vmem:[%s3 + $0x8] sm:$0xff]
        %v1298 = vld [vmem:[%s3 + $0x10] sm:$0xff]
        %v1299 = vld [vmem:[%s3 + $0x18] sm:$0xff]
        %v1300 = vld [vmem:[%s3 + $0x20] sm:$0xff]
        %v1301 = vld [vmem:[%s3 + $0x28] sm:$0xff]
        %v1302 = vld [vmem:[%s3 + $0x30] sm:$0xff]
        %v1303 = vld [vmem:[%s3 + $0x38] sm:$0xff]
        %v1304 = vld [vmem:[%s3 + $0x40] sm:$0xff]
        %v1305 = vld [vmem:[%s3 + $0x48] sm:$0xff]
        %v1306 = vld [vmem:[%s3 + $0x50] sm:$0xff]
        %v1307 = vld [vmem:[%s3 + $0x58] sm:$0xff]
        %v1308 = vld [vmem:[%s3 + $0x60] sm:$0xff]
        %v1309 = vld [vmem:[%s3 + $0x68] sm:$0xff]
        %v1310 = vld [vmem:[%s3 + $0x70] sm:$0xff]
        %v1311 = vld [vmem:[%s3 + $0x78] sm:$0xff]
        %v1312 = vld [vmem:[%s3 + $0x80] sm:$0xff]
        %v1313 = vld [vmem:[%s3 + $0x88] sm:$0xff]
        %v1314 = vld [vmem:[%s3 + $0x90] sm:$0xff]
        %v1315 = vld [vmem:[%s3 + $0x98] sm:$0xff]
        %v1316 = vld [vmem:[%s3 + $0xa0] sm:$0xff]
        %v1317 = vld [vmem:[%s3 + $0xa8] sm:$0xff]
        %v1318 = vld [vmem:[%s3 + $0xb0] sm:$0xff]
        %v1319 = vld [vmem:[%s3 + $0xb8] sm:$0xff]
        %v1320 = vld [vmem:[%s3 + $0xc0] sm:$0xff]
        %v1321 = vld [vmem:[%s3 + $0xc8] sm:$0xff]
        %v1322 = vld [vmem:[%s3 + $0xd0] sm:$0xff]
        %v1323 = vld [vmem:[%s3 + $0xd8] sm:$0xff]
        %v1324 = vld [vmem:[%s3 + $0xe0] sm:$0xff]
        %v1325 = vld [vmem:[%s3 + $0xe8] sm:$0xff]
        %v1326 = vld [vmem:[%s3 + $0xf0] sm:$0xff]
        %v1327 = vld [vmem:[%s3 + $0xf8] sm:$0xff]
        %v1328 = vld [vmem:[%s3 + $0x100] sm:$0xff]
        %v1329 = vld [vmem:[%s3 + $0x108] sm:$0xff]
        %v1330 = vld [vmem:[%s3 + $0x110] sm:$0xff]
        %v1331 = vld [vmem:[%s3 + $0x118] sm:$0xff]
        %v1332 = vld [vmem:[%s3 + $0x120] sm:$0xff]
        %v1333 = vld [vmem:[%s3 + $0x128] sm:$0xff]
        %v1334 = vld [vmem:[%s3 + $0x130] sm:$0xff]
        %v1335 = vld [vmem:[%s3 + $0x138] sm:$0xff]
        %v1336 = vld [vmem:[%s3 + $0x140] sm:$0xff]
        %v1337 = vld [vmem:[%s3 + $0x148] sm:$0xff]
        %v1338 = vld [vmem:[%s3 + $0x150] sm:$0xff]
        %v1339 = vld [vmem:[%s3 + $0x158] sm:$0xff]
        %v1340 = vld [vmem:[%s3 + $0x160] sm:$0xff]
        %v1341 = vld [vmem:[%s3 + $0x168] sm:$0xff]
        %v1342 = vld [vmem:[%s3 + $0x170] sm:$0xff]
        %v1343 = vld [vmem:[%s3 + $0x178] sm:$0xff]
        %v1344 = vld [vmem:[%s3 + $0x180] sm:$0xff]
        %v1345 = vld [vmem:[%s3 + $0x188] sm:$0xff]
        %v1346 = vld [vmem:[%s3 + $0x190] sm:$0xff]
        %v1347 = vld [vmem:[%s3 + $0x198] sm:$0xff]
        %v1348 = vld [vmem:[%s3 + $0x1a0] sm:$0xff]
        %v1349 = vld [vmem:[%s3 + $0x1a8] sm:$0xff]
        %v1350 = vld [vmem:[%s3 + $0x1b0] sm:$0xff]
        %v1351 = vld [vmem:[%s3 + $0x1b8] sm:$0xff]
        %v1352 = vld [vmem:[%s3 + $0x1c0] sm:$0xff]
        %v1353 = vld [vmem:[%s3 + $0x1c8] sm:$0xff]
        %v1354 = vld [vmem:[%s3 + $0x1d0] sm:$0xff]
        %v1355 = vld [vmem:[%s3 + $0x1d8] sm:$0xff]
        %v1356 = vld [vmem:[%s3 + $0x1e0] sm:$0xff]
        %v1357 = vld [vmem:[%s3 + $0x1e8] sm:$0xff]
        %v1358 = vld [vmem:[%s3 + $0x1f0] sm:$0xff]
        %v1359 = vld [vmem:[%s3 + $0x1f8] sm:$0xff]
        %v1360 = vld [vmem:[%s4] sm:$0xff]
        %v1361 = vld [vmem:[%s4 + $0x8] sm:$0xff]
        %v1362 = vld [vmem:[%s4 + $0x10] sm:$0xff]
        %v1363 = vld [vmem:[%s4 + $0x18] sm:$0xff]
        %v1364 = vld [vmem:[%s4 + $0x20] sm:$0xff]
        %v1365 = vld [vmem:[%s4 + $0x28] sm:$0xff]
        %v1366 = vld [vmem:[%s4 + $0x30] sm:$0xff]
        %v1367 = vld [vmem:[%s4 + $0x38] sm:$0xff]
        %v1368 = vld [vmem:[%s4 + $0x40] sm:$0xff]
        %v1369 = vld [vmem:[%s4 + $0x48] sm:$0xff]
        %v1370 = vld [vmem:[%s4 + $0x50] sm:$0xff]
        %v1371 = vld [vmem:[%s4 + $0x58] sm:$0xff]
        %v1372 = vld [vmem:[%s4 + $0x60] sm:$0xff]
        %v1373 = vld [vmem:[%s4 + $0x68] sm:$0xff]
        %v1374 = vld [vmem:[%s4 + $0x70] sm:$0xff]
        %v1375 = vld [vmem:[%s4 + $0x78] sm:$0xff]
        %v1376 = vld [vmem:[%s4 + $0x80] sm:$0xff]
        %v1377 = vld [vmem:[%s4 + $0x88] sm:$0xff]
        %v1378 = vld [vmem:[%s4 + $0x90] sm:$0xff]
        %v1379 = vld [vmem:[%s4 + $0x98] sm:$0xff]
        %v1380 = vld [vmem:[%s4 + $0xa0] sm:$0xff]
        %v1381 = vld [vmem:[%s4 + $0xa8] sm:$0xff]
        %v1382 = vld [vmem:[%s4 + $0xb0] sm:$0xff]
        %v1383 = vld [vmem:[%s4 + $0xb8] sm:$0xff]
        %v1384 = vld [vmem:[%s4 + $0xc0] sm:$0xff]
        %v1385 = vld [vmem:[%s4 + $0xc8] sm:$0xff]
        %v1386 = vld [vmem:[%s4 + $0xd0] sm:$0xff]
        %v1387 = vld [vmem:[%s4 + $0xd8] sm:$0xff]
        %v1388 = vld [vmem:[%s4 + $0xe0] sm:$0xff]
        %v1389 = vld [vmem:[%s4 + $0xe8] sm:$0xff]
        %v1390 = vld [vmem:[%s4 + $0xf0] sm:$0xff]
        %v1391 = vld [vmem:[%s4 + $0xf8] sm:$0xff]
        %1393 = vset.pattern.permute.xlu0 0
        %1394 = vperm.xlu0 %1393, %v1360
        %v1395 = vpop.permute.xlu0 %1394
        %1398 = vset.pattern.permute.xlu0 0
        %1399 = vperm.xlu0 %1398, %v1361
        %v1400 = vpop.permute.xlu0 %1399
        %1403 = vset.pattern.permute.xlu0 0
        %1404 = vperm.xlu0 %1403, %v1362
        %v1405 = vpop.permute.xlu0 %1404
        %1408 = vset.pattern.permute.xlu0 0
        %1409 = vperm.xlu0 %1408, %v1363
        %v1410 = vpop.permute.xlu0 %1409
        %1413 = vset.pattern.permute.xlu0 0
        %1414 = vperm.xlu0 %1413, %v1364
        %v1415 = vpop.permute.xlu0 %1414
        %1418 = vset.pattern.permute.xlu0 0
        %1419 = vperm.xlu0 %1418, %v1365
        %v1420 = vpop.permute.xlu0 %1419
        %1423 = vset.pattern.permute.xlu0 0
        %1424 = vperm.xlu0 %1423, %v1366
        %v1425 = vpop.permute.xlu0 %1424
        %1428 = vset.pattern.permute.xlu0 0
        %1429 = vperm.xlu0 %1428, %v1367
        %v1430 = vpop.permute.xlu0 %1429
        %1433 = vset.pattern.permute.xlu0 0
        %1434 = vperm.xlu0 %1433, %v1368
        %v1435 = vpop.permute.xlu0 %1434
        %1438 = vset.pattern.permute.xlu0 0
        %1439 = vperm.xlu0 %1438, %v1369
        %v1440 = vpop.permute.xlu0 %1439
        %1443 = vset.pattern.permute.xlu0 0
        %1444 = vperm.xlu0 %1443, %v1370
        %v1445 = vpop.permute.xlu0 %1444
        %1448 = vset.pattern.permute.xlu0 0
        %1449 = vperm.xlu0 %1448, %v1371
        %v1450 = vpop.permute.xlu0 %1449
        %1453 = vset.pattern.permute.xlu0 0
        %1454 = vperm.xlu0 %1453, %v1372
        %v1455 = vpop.permute.xlu0 %1454
        %1458 = vset.pattern.permute.xlu0 0
        %1459 = vperm.xlu0 %1458, %v1373
        %v1460 = vpop.permute.xlu0 %1459
        %1463 = vset.pattern.permute.xlu0 0
        %1464 = vperm.xlu0 %1463, %v1374
        %v1465 = vpop.permute.xlu0 %1464
        %1468 = vset.pattern.permute.xlu0 0
        %1469 = vperm.xlu0 %1468, %v1375
        %v1470 = vpop.permute.xlu0 %1469
        %1473 = vset.pattern.permute.xlu0 0
        %1474 = vperm.xlu0 %1473, %v1376
        %v1475 = vpop.permute.xlu0 %1474
        %1478 = vset.pattern.permute.xlu0 0
        %1479 = vperm.xlu0 %1478, %v1377
        %v1480 = vpop.permute.xlu0 %1479
        %1483 = vset.pattern.permute.xlu0 0
        %1484 = vperm.xlu0 %1483, %v1378
        %v1485 = vpop.permute.xlu0 %1484
        %1488 = vset.pattern.permute.xlu0 0
        %1489 = vperm.xlu0 %1488, %v1379
        %v1490 = vpop.permute.xlu0 %1489
        %1493 = vset.pattern.permute.xlu0 0
        %1494 = vperm.xlu0 %1493, %v1380
        %v1495 = vpop.permute.xlu0 %1494
        %1498 = vset.pattern.permute.xlu0 0
        %1499 = vperm.xlu0 %1498, %v1381
        %v1500 = vpop.permute.xlu0 %1499
        %1503 = vset.pattern.permute.xlu0 0
        %1504 = vperm.xlu0 %1503, %v1382
        %v1505 = vpop.permute.xlu0 %1504
        %1508 = vset.pattern.permute.xlu0 0
        %1509 = vperm.xlu0 %1508, %v1383
        %v1510 = vpop.permute.xlu0 %1509
        %1513 = vset.pattern.permute.xlu0 0
        %1514 = vperm.xlu0 %1513, %v1384
        %v1515 = vpop.permute.xlu0 %1514
        %1518 = vset.pattern.permute.xlu0 0
        %1519 = vperm.xlu0 %1518, %v1385
        %v1520 = vpop.permute.xlu0 %1519
        %1523 = vset.pattern.permute.xlu0 0
        %1524 = vperm.xlu0 %1523, %v1386
        %v1525 = vpop.permute.xlu0 %1524
        %1528 = vset.pattern.permute.xlu0 0
        %1529 = vperm.xlu0 %1528, %v1387
        %v1530 = vpop.permute.xlu0 %1529
        %1533 = vset.pattern.permute.xlu0 0
        %1534 = vperm.xlu0 %1533, %v1388
        %v1535 = vpop.permute.xlu0 %1534
        %1538 = vset.pattern.permute.xlu0 0
        %1539 = vperm.xlu0 %1538, %v1389
        %v1540 = vpop.permute.xlu0 %1539
        %1543 = vset.pattern.permute.xlu0 0
        %1544 = vperm.xlu0 %1543, %v1390
        %v1545 = vpop.permute.xlu0 %1544
        %1548 = vset.pattern.permute.xlu0 0
        %1549 = vperm.xlu0 %1548, %v1391
        %v1550 = vpop.permute.xlu0 %1549
        %v1616 = vunpack.c.l.b16 %v1296
        %v1617 = vunpack.c.h.b16 %v1296
        %v1618 = vunpack.c.l.b16 %v1297
        %v1619 = vunpack.c.h.b16 %v1297
        %v1620 = vunpack.c.l.b16 %v1298
        %v1621 = vunpack.c.h.b16 %v1298
        %v1622 = vunpack.c.l.b16 %v1299
        %v1623 = vunpack.c.h.b16 %v1299
        %v1624 = vunpack.c.l.b16 %v1300
        %v1625 = vunpack.c.h.b16 %v1300
        %v1626 = vunpack.c.l.b16 %v1301
        %v1627 = vunpack.c.h.b16 %v1301
        %v1628 = vunpack.c.l.b16 %v1302
        %v1629 = vunpack.c.h.b16 %v1302
        %v1630 = vunpack.c.l.b16 %v1303
        %v1631 = vunpack.c.h.b16 %v1303
        %v1632 = vunpack.c.l.b16 %v1304
        %v1633 = vunpack.c.h.b16 %v1304
        %v1634 = vunpack.c.l.b16 %v1305
        %v1635 = vunpack.c.h.b16 %v1305
        %v1636 = vunpack.c.l.b16 %v1306
        %v1637 = vunpack.c.h.b16 %v1306
        %v1638 = vunpack.c.l.b16 %v1307
        %v1639 = vunpack.c.h.b16 %v1307
        %v1640 = vunpack.c.l.b16 %v1308
        %v1641 = vunpack.c.h.b16 %v1308
        %v1642 = vunpack.c.l.b16 %v1309
        %v1643 = vunpack.c.h.b16 %v1309
        %v1644 = vunpack.c.l.b16 %v1310
        %v1645 = vunpack.c.h.b16 %v1310
        %v1646 = vunpack.c.l.b16 %v1311
        %v1647 = vunpack.c.h.b16 %v1311
        %v1648 = vunpack.c.l.b16 %v1312
        %v1649 = vunpack.c.h.b16 %v1312
        %v1650 = vunpack.c.l.b16 %v1313
        %v1651 = vunpack.c.h.b16 %v1313
        %v1652 = vunpack.c.l.b16 %v1314
        %v1653 = vunpack.c.h.b16 %v1314
        %v1654 = vunpack.c.l.b16 %v1315
        %v1655 = vunpack.c.h.b16 %v1315
        %v1656 = vunpack.c.l.b16 %v1316
        %v1657 = vunpack.c.h.b16 %v1316
        %v1658 = vunpack.c.l.b16 %v1317
        %v1659 = vunpack.c.h.b16 %v1317
        %v1660 = vunpack.c.l.b16 %v1318
        %v1661 = vunpack.c.h.b16 %v1318
        %v1662 = vunpack.c.l.b16 %v1319
        %v1663 = vunpack.c.h.b16 %v1319
        %v1664 = vunpack.c.l.b16 %v1320
        %v1665 = vunpack.c.h.b16 %v1320
        %v1666 = vunpack.c.l.b16 %v1321
        %v1667 = vunpack.c.h.b16 %v1321
        %v1668 = vunpack.c.l.b16 %v1322
        %v1669 = vunpack.c.h.b16 %v1322
        %v1670 = vunpack.c.l.b16 %v1323
        %v1671 = vunpack.c.h.b16 %v1323
        %v1672 = vunpack.c.l.b16 %v1324
        %v1673 = vunpack.c.h.b16 %v1324
        %v1674 = vunpack.c.l.b16 %v1325
        %v1675 = vunpack.c.h.b16 %v1325
        %v1676 = vunpack.c.l.b16 %v1326
        %v1677 = vunpack.c.h.b16 %v1326
        %v1678 = vunpack.c.l.b16 %v1327
        %v1679 = vunpack.c.h.b16 %v1327
        %v1680 = vunpack.c.l.b16 %v1328
        %v1681 = vunpack.c.h.b16 %v1328
        %v1682 = vunpack.c.l.b16 %v1329
        %v1683 = vunpack.c.h.b16 %v1329
        %v1684 = vunpack.c.l.b16 %v1330
        %v1685 = vunpack.c.h.b16 %v1330
        %v1686 = vunpack.c.l.b16 %v1331
        %v1687 = vunpack.c.h.b16 %v1331
        %v1688 = vunpack.c.l.b16 %v1332
        %v1689 = vunpack.c.h.b16 %v1332
        %v1690 = vunpack.c.l.b16 %v1333
        %v1691 = vunpack.c.h.b16 %v1333
        %v1692 = vunpack.c.l.b16 %v1334
        %v1693 = vunpack.c.h.b16 %v1334
        %v1694 = vunpack.c.l.b16 %v1335
        %v1695 = vunpack.c.h.b16 %v1335
        %v1696 = vunpack.c.l.b16 %v1336
        %v1697 = vunpack.c.h.b16 %v1336
        %v1698 = vunpack.c.l.b16 %v1337
        %v1699 = vunpack.c.h.b16 %v1337
        %v1700 = vunpack.c.l.b16 %v1338
        %v1701 = vunpack.c.h.b16 %v1338
        %v1702 = vunpack.c.l.b16 %v1339
        %v1703 = vunpack.c.h.b16 %v1339
        %v1704 = vunpack.c.l.b16 %v1340
        %v1705 = vunpack.c.h.b16 %v1340
        %v1706 = vunpack.c.l.b16 %v1341
        %v1707 = vunpack.c.h.b16 %v1341
        %v1708 = vunpack.c.l.b16 %v1342
        %v1709 = vunpack.c.h.b16 %v1342
        %v1710 = vunpack.c.l.b16 %v1343
        %v1711 = vunpack.c.h.b16 %v1343
        %v1712 = vunpack.c.l.b16 %v1344
        %v1713 = vunpack.c.h.b16 %v1344
        %v1714 = vunpack.c.l.b16 %v1345
        %v1715 = vunpack.c.h.b16 %v1345
        %v1716 = vunpack.c.l.b16 %v1346
        %v1717 = vunpack.c.h.b16 %v1346
        %v1718 = vunpack.c.l.b16 %v1347
        %v1719 = vunpack.c.h.b16 %v1347
        %v1720 = vunpack.c.l.b16 %v1348
        %v1721 = vunpack.c.h.b16 %v1348
        %v1722 = vunpack.c.l.b16 %v1349
        %v1723 = vunpack.c.h.b16 %v1349
        %v1724 = vunpack.c.l.b16 %v1350
        %v1725 = vunpack.c.h.b16 %v1350
        %v1726 = vunpack.c.l.b16 %v1351
        %v1727 = vunpack.c.h.b16 %v1351
        %v1728 = vunpack.c.l.b16 %v1352
        %v1729 = vunpack.c.h.b16 %v1352
        %v1730 = vunpack.c.l.b16 %v1353
        %v1731 = vunpack.c.h.b16 %v1353
        %v1732 = vunpack.c.l.b16 %v1354
        %v1733 = vunpack.c.h.b16 %v1354
        %v1734 = vunpack.c.l.b16 %v1355
        %v1735 = vunpack.c.h.b16 %v1355
        %v1736 = vunpack.c.l.b16 %v1356
        %v1737 = vunpack.c.h.b16 %v1356
        %v1738 = vunpack.c.l.b16 %v1357
        %v1739 = vunpack.c.h.b16 %v1357
        %v1740 = vunpack.c.l.b16 %v1358
        %v1741 = vunpack.c.h.b16 %v1358
        %v1742 = vunpack.c.l.b16 %v1359
        %v1743 = vunpack.c.h.b16 %v1359
        %v1744 = vpack.c.b16 %v1620, %v1616
        %v1745 = vpack.c.b16 %v1621, %v1617
        %v1746 = vpack.c.b16 %v1622, %v1618
        %v1747 = vpack.c.b16 %v1623, %v1619
        %v1748 = vpack.c.b16 %v1628, %v1624
        %v1749 = vpack.c.b16 %v1629, %v1625
        %v1750 = vpack.c.b16 %v1630, %v1626
        %v1751 = vpack.c.b16 %v1631, %v1627
        %v1752 = vpack.c.b16 %v1636, %v1632
        %v1753 = vpack.c.b16 %v1637, %v1633
        %v1754 = vpack.c.b16 %v1638, %v1634
        %v1755 = vpack.c.b16 %v1639, %v1635
        %v1756 = vpack.c.b16 %v1644, %v1640
        %v1757 = vpack.c.b16 %v1645, %v1641
        %v1758 = vpack.c.b16 %v1646, %v1642
        %v1759 = vpack.c.b16 %v1647, %v1643
        %v1760 = vpack.c.b16 %v1652, %v1648
        %v1761 = vpack.c.b16 %v1653, %v1649
        %v1762 = vpack.c.b16 %v1654, %v1650
        %v1763 = vpack.c.b16 %v1655, %v1651
        %v1764 = vpack.c.b16 %v1660, %v1656
        %v1765 = vpack.c.b16 %v1661, %v1657
        %v1766 = vpack.c.b16 %v1662, %v1658
        %v1767 = vpack.c.b16 %v1663, %v1659
        %v1768 = vpack.c.b16 %v1668, %v1664
        %v1769 = vpack.c.b16 %v1669, %v1665
        %v1770 = vpack.c.b16 %v1670, %v1666
        %v1771 = vpack.c.b16 %v1671, %v1667
        %v1772 = vpack.c.b16 %v1676, %v1672
        %v1773 = vpack.c.b16 %v1677, %v1673
        %v1774 = vpack.c.b16 %v1678, %v1674
        %v1775 = vpack.c.b16 %v1679, %v1675
        %v1776 = vpack.c.b16 %v1684, %v1680
        %v1777 = vpack.c.b16 %v1685, %v1681
        %v1778 = vpack.c.b16 %v1686, %v1682
        %v1779 = vpack.c.b16 %v1687, %v1683
        %v1780 = vpack.c.b16 %v1692, %v1688
        %v1781 = vpack.c.b16 %v1693, %v1689
        %v1782 = vpack.c.b16 %v1694, %v1690
        %v1783 = vpack.c.b16 %v1695, %v1691
        %v1784 = vpack.c.b16 %v1700, %v1696
        %v1785 = vpack.c.b16 %v1701, %v1697
        %v1786 = vpack.c.b16 %v1702, %v1698
        %v1787 = vpack.c.b16 %v1703, %v1699
        %v1788 = vpack.c.b16 %v1708, %v1704
        %v1789 = vpack.c.b16 %v1709, %v1705
        %v1790 = vpack.c.b16 %v1710, %v1706
        %v1791 = vpack.c.b16 %v1711, %v1707
        %v1792 = vpack.c.b16 %v1716, %v1712
        %v1793 = vpack.c.b16 %v1717, %v1713
        %v1794 = vpack.c.b16 %v1718, %v1714
        %v1795 = vpack.c.b16 %v1719, %v1715
        %v1796 = vpack.c.b16 %v1724, %v1720
        %v1797 = vpack.c.b16 %v1725, %v1721
        %v1798 = vpack.c.b16 %v1726, %v1722
        %v1799 = vpack.c.b16 %v1727, %v1723
        %v1800 = vpack.c.b16 %v1732, %v1728
        %v1801 = vpack.c.b16 %v1733, %v1729
        %v1802 = vpack.c.b16 %v1734, %v1730
        %v1803 = vpack.c.b16 %v1735, %v1731
        %v1804 = vpack.c.b16 %v1740, %v1736
        %v1805 = vpack.c.b16 %v1741, %v1737
        %v1806 = vpack.c.b16 %v1742, %v1738
        %v1807 = vpack.c.b16 %v1743, %v1739
        %1872 = vmatpush.bf16.msra.mxu0 %v1271
        %1873 = vmatpush.bf16.msra.mxu0 %v1270
        %1874 = vmatpush.bf16.msra.mxu0 %v1269
        %1875 = vmatpush.bf16.msra.mxu0 %v1268
        %1876 = vmatpush.bf16.msra.mxu0 %v1267
        %1877 = vmatpush.bf16.msra.mxu0 %v1266
        %1878 = vmatpush.bf16.msra.mxu0 %v1265
        %1879 = vmatpush.bf16.msra.mxu0 %v1264
        %1880 = vmatmul.bf16.gmra.mxu0 %v1744
        %v1881 = vpop.f32.mrf.mxu0
        %v1882 = vadd.f32 %v1395, %v1881
        %v1883 = vpop.f32.mrf.mxu0
        %v1884 = vadd.f32 %v1400, %v1883
        %1885 = vmatmul.bf16.gmra.mxu0 %v1748
        %v1886 = vpop.f32.mrf.mxu0
        %v1887 = vadd.f32 %v1405, %v1886
        %v1888 = vpop.f32.mrf.mxu0
        %v1889 = vadd.f32 %v1410, %v1888
        %1890 = vmatmul.bf16.gmra.mxu0 %v1752
        %v1891 = vpop.f32.mrf.mxu0
        %v1892 = vadd.f32 %v1415, %v1891
        %v1893 = vpop.f32.mrf.mxu0
        %v1894 = vadd.f32 %v1420, %v1893
        %1895 = vmatmul.bf16.gmra.mxu0 %v1756
        %v1896 = vpop.f32.mrf.mxu0
        %v1897 = vadd.f32 %v1425, %v1896
        %v1898 = vpop.f32.mrf.mxu0
        %v1899 = vadd.f32 %v1430, %v1898
        %1900 = vmatmul.bf16.gmra.mxu0 %v1760
        %v1901 = vpop.f32.mrf.mxu0
        %v1902 = vadd.f32 %v1435, %v1901
        %v1903 = vpop.f32.mrf.mxu0
        %v1904 = vadd.f32 %v1440, %v1903
        %1905 = vmatmul.bf16.gmra.mxu0 %v1764
        %v1906 = vpop.f32.mrf.mxu0
        %v1907 = vadd.f32 %v1445, %v1906
        %v1908 = vpop.f32.mrf.mxu0
        %v1909 = vadd.f32 %v1450, %v1908
        %1910 = vmatmul.bf16.gmra.mxu0 %v1768
        %v1911 = vpop.f32.mrf.mxu0
        %v1912 = vadd.f32 %v1455, %v1911
        %v1913 = vpop.f32.mrf.mxu0
        %v1914 = vadd.f32 %v1460, %v1913
        %1915 = vmatmul.bf16.gmra.mxu0 %v1772
        %v1916 = vpop.f32.mrf.mxu0
        %v1917 = vadd.f32 %v1465, %v1916
        %v1918 = vpop.f32.mrf.mxu0
        %v1919 = vadd.f32 %v1470, %v1918
        %1920 = vmatmul.bf16.gmra.mxu0 %v1776
        %v1921 = vpop.f32.mrf.mxu0
        %v1922 = vadd.f32 %v1475, %v1921
        %v1923 = vpop.f32.mrf.mxu0
        %v1924 = vadd.f32 %v1480, %v1923
        %1925 = vmatmul.bf16.gmra.mxu0 %v1780
        %v1926 = vpop.f32.mrf.mxu0
        %v1927 = vadd.f32 %v1485, %v1926
        %v1928 = vpop.f32.mrf.mxu0
        %v1929 = vadd.f32 %v1490, %v1928
        %1930 = vmatmul.bf16.gmra.mxu0 %v1784
        %v1931 = vpop.f32.mrf.mxu0
        %v1932 = vadd.f32 %v1495, %v1931
        %v1933 = vpop.f32.mrf.mxu0
        %v1934 = vadd.f32 %v1500, %v1933
        %1935 = vmatmul.bf16.gmra.mxu0 %v1788
        %v1936 = vpop.f32.mrf.mxu0
        %v1937 = vadd.f32 %v1505, %v1936
        %v1938 = vpop.f32.mrf.mxu0
        %v1939 = vadd.f32 %v1510, %v1938
        %1940 = vmatmul.bf16.gmra.mxu0 %v1792
        %v1941 = vpop.f32.mrf.mxu0
        %v1942 = vadd.f32 %v1515, %v1941
        %v1943 = vpop.f32.mrf.mxu0
        %v1944 = vadd.f32 %v1520, %v1943
        %1945 = vmatmul.bf16.gmra.mxu0 %v1796
        %v1946 = vpop.f32.mrf.mxu0
        %v1947 = vadd.f32 %v1525, %v1946
        %v1948 = vpop.f32.mrf.mxu0
        %v1949 = vadd.f32 %v1530, %v1948
        %1950 = vmatmul.bf16.gmra.mxu0 %v1800
        %v1951 = vpop.f32.mrf.mxu0
        %v1952 = vadd.f32 %v1535, %v1951
        %v1953 = vpop.f32.mrf.mxu0
        %v1954 = vadd.f32 %v1540, %v1953
        %1955 = vmatmul.bf16.gmra.mxu0 %v1804
        %v1956 = vpop.f32.mrf.mxu0
        %v1957 = vadd.f32 %v1545, %v1956
        %v1958 = vpop.f32.mrf.mxu0
        %v1959 = vadd.f32 %v1550, %v1958
        %1960 = vdwg.mxu0
        %1961 = vmatpush.bf16.msra.mxu0 %v1279
        %1962 = vmatpush.bf16.msra.mxu0 %v1278
        %1963 = vmatpush.bf16.msra.mxu0 %v1277
        %1964 = vmatpush.bf16.msra.mxu0 %v1276
        %1965 = vmatpush.bf16.msra.mxu0 %v1275
        %1966 = vmatpush.bf16.msra.mxu0 %v1274
        %1967 = vmatpush.bf16.msra.mxu0 %v1273
        %1968 = vmatpush.bf16.msra.mxu0 %v1272
        %1969 = vmatmul.bf16.gmra.mxu0 %v1745
        %v1970 = vpop.f32.mrf.mxu0
        %v1971 = vadd.f32 %v1882, %v1970
        %v1972 = vpop.f32.mrf.mxu0
        %v1973 = vadd.f32 %v1884, %v1972
        %1974 = vmatmul.bf16.gmra.mxu0 %v1749
        %v1975 = vpop.f32.mrf.mxu0
        %v1976 = vadd.f32 %v1887, %v1975
        %v1977 = vpop.f32.mrf.mxu0
        %v1978 = vadd.f32 %v1889, %v1977
        %1979 = vmatmul.bf16.gmra.mxu0 %v1753
        %v1980 = vpop.f32.mrf.mxu0
        %v1981 = vadd.f32 %v1892, %v1980
        %v1982 = vpop.f32.mrf.mxu0
        %v1983 = vadd.f32 %v1894, %v1982
        %1984 = vmatmul.bf16.gmra.mxu0 %v1757
        %v1985 = vpop.f32.mrf.mxu0
        %v1986 = vadd.f32 %v1897, %v1985
        %v1987 = vpop.f32.mrf.mxu0
        %v1988 = vadd.f32 %v1899, %v1987
        %1989 = vmatmul.bf16.gmra.mxu0 %v1761
        %v1990 = vpop.f32.mrf.mxu0
        %v1991 = vadd.f32 %v1902, %v1990
        %v1992 = vpop.f32.mrf.mxu0
        %v1993 = vadd.f32 %v1904, %v1992
        %1994 = vmatmul.bf16.gmra.mxu0 %v1765
        %v1995 = vpop.f32.mrf.mxu0
        %v1996 = vadd.f32 %v1907, %v1995
        %v1997 = vpop.f32.mrf.mxu0
        %v1998 = vadd.f32 %v1909, %v1997
        %1999 = vmatmul.bf16.gmra.mxu0 %v1769
        %v2000 = vpop.f32.mrf.mxu0
        %v2001 = vadd.f32 %v1912, %v2000
        %v2002 = vpop.f32.mrf.mxu0
        %v2003 = vadd.f32 %v1914, %v2002
        %2004 = vmatmul.bf16.gmra.mxu0 %v1773
        %v2005 = vpop.f32.mrf.mxu0
        %v2006 = vadd.f32 %v1917, %v2005
        %v2007 = vpop.f32.mrf.mxu0
        %v2008 = vadd.f32 %v1919, %v2007
        %2009 = vmatmul.bf16.gmra.mxu0 %v1777
        %v2010 = vpop.f32.mrf.mxu0
        %v2011 = vadd.f32 %v1922, %v2010
        %v2012 = vpop.f32.mrf.mxu0
        %v2013 = vadd.f32 %v1924, %v2012
        %2014 = vmatmul.bf16.gmra.mxu0 %v1781
        %v2015 = vpop.f32.mrf.mxu0
        %v2016 = vadd.f32 %v1927, %v2015
        %v2017 = vpop.f32.mrf.mxu0
        %v2018 = vadd.f32 %v1929, %v2017
        %2019 = vmatmul.bf16.gmra.mxu0 %v1785
        %v2020 = vpop.f32.mrf.mxu0
        %v2021 = vadd.f32 %v1932, %v2020
        %v2022 = vpop.f32.mrf.mxu0
        %v2023 = vadd.f32 %v1934, %v2022
        %2024 = vmatmul.bf16.gmra.mxu0 %v1789
        %v2025 = vpop.f32.mrf.mxu0
        %v2026 = vadd.f32 %v1937, %v2025
        %v2027 = vpop.f32.mrf.mxu0
        %v2028 = vadd.f32 %v1939, %v2027
        %2029 = vmatmul.bf16.gmra.mxu0 %v1793
        %v2030 = vpop.f32.mrf.mxu0
        %v2031 = vadd.f32 %v1942, %v2030
        %v2032 = vpop.f32.mrf.mxu0
        %v2033 = vadd.f32 %v1944, %v2032
        %2034 = vmatmul.bf16.gmra.mxu0 %v1797
        %v2035 = vpop.f32.mrf.mxu0
        %v2036 = vadd.f32 %v1947, %v2035
        %v2037 = vpop.f32.mrf.mxu0
        %v2038 = vadd.f32 %v1949, %v2037
        %2039 = vmatmul.bf16.gmra.mxu0 %v1801
        %v2040 = vpop.f32.mrf.mxu0
        %v2041 = vadd.f32 %v1952, %v2040
        %v2042 = vpop.f32.mrf.mxu0
        %v2043 = vadd.f32 %v1954, %v2042
        %2044 = vmatmul.bf16.gmra.mxu0 %v1805
        %v2045 = vpop.f32.mrf.mxu0
        %v2046 = vadd.f32 %v1957, %v2045
        %v2047 = vpop.f32.mrf.mxu0
        %v2048 = vadd.f32 %v1959, %v2047
        %2049 = vdwg.mxu0
        %2050 = vmatpush.bf16.msra.mxu0 %v1287
        %2051 = vmatpush.bf16.msra.mxu0 %v1286
        %2052 = vmatpush.bf16.msra.mxu0 %v1285
        %2053 = vmatpush.bf16.msra.mxu0 %v1284
        %2054 = vmatpush.bf16.msra.mxu0 %v1283
        %2055 = vmatpush.bf16.msra.mxu0 %v1282
        %2056 = vmatpush.bf16.msra.mxu0 %v1281
        %2057 = vmatpush.bf16.msra.mxu0 %v1280
        %2058 = vmatmul.bf16.gmra.mxu0 %v1746
        %v2059 = vpop.f32.mrf.mxu0
        %v2060 = vadd.f32 %v1971, %v2059
        %v2061 = vpop.f32.mrf.mxu0
        %v2062 = vadd.f32 %v1973, %v2061
        %2063 = vmatmul.bf16.gmra.mxu0 %v1750
        %v2064 = vpop.f32.mrf.mxu0
        %v2065 = vadd.f32 %v1976, %v2064
        %v2066 = vpop.f32.mrf.mxu0
        %v2067 = vadd.f32 %v1978, %v2066
        %2068 = vmatmul.bf16.gmra.mxu0 %v1754
        %v2069 = vpop.f32.mrf.mxu0
        %v2070 = vadd.f32 %v1981, %v2069
        %v2071 = vpop.f32.mrf.mxu0
        %v2072 = vadd.f32 %v1983, %v2071
        %2073 = vmatmul.bf16.gmra.mxu0 %v1758
        %v2074 = vpop.f32.mrf.mxu0
        %v2075 = vadd.f32 %v1986, %v2074
        %v2076 = vpop.f32.mrf.mxu0
        %v2077 = vadd.f32 %v1988, %v2076
        %2078 = vmatmul.bf16.gmra.mxu0 %v1762
        %v2079 = vpop.f32.mrf.mxu0
        %v2080 = vadd.f32 %v1991, %v2079
        %v2081 = vpop.f32.mrf.mxu0
        %v2082 = vadd.f32 %v1993, %v2081
        %2083 = vmatmul.bf16.gmra.mxu0 %v1766
        %v2084 = vpop.f32.mrf.mxu0
        %v2085 = vadd.f32 %v1996, %v2084
        %v2086 = vpop.f32.mrf.mxu0
        %v2087 = vadd.f32 %v1998, %v2086
        %2088 = vmatmul.bf16.gmra.mxu0 %v1770
        %v2089 = vpop.f32.mrf.mxu0
        %v2090 = vadd.f32 %v2001, %v2089
        %v2091 = vpop.f32.mrf.mxu0
        %v2092 = vadd.f32 %v2003, %v2091
        %2093 = vmatmul.bf16.gmra.mxu0 %v1774
        %v2094 = vpop.f32.mrf.mxu0
        %v2095 = vadd.f32 %v2006, %v2094
        %v2096 = vpop.f32.mrf.mxu0
        %v2097 = vadd.f32 %v2008, %v2096
        %2098 = vmatmul.bf16.gmra.mxu0 %v1778
        %v2099 = vpop.f32.mrf.mxu0
        %v2100 = vadd.f32 %v2011, %v2099
        %v2101 = vpop.f32.mrf.mxu0
        %v2102 = vadd.f32 %v2013, %v2101
        %2103 = vmatmul.bf16.gmra.mxu0 %v1782
        %v2104 = vpop.f32.mrf.mxu0
        %v2105 = vadd.f32 %v2016, %v2104
        %v2106 = vpop.f32.mrf.mxu0
        %v2107 = vadd.f32 %v2018, %v2106
        %2108 = vmatmul.bf16.gmra.mxu0 %v1786
        %v2109 = vpop.f32.mrf.mxu0
        %v2110 = vadd.f32 %v2021, %v2109
        %v2111 = vpop.f32.mrf.mxu0
        %v2112 = vadd.f32 %v2023, %v2111
        %2113 = vmatmul.bf16.gmra.mxu0 %v1790
        %v2114 = vpop.f32.mrf.mxu0
        %v2115 = vadd.f32 %v2026, %v2114
        %v2116 = vpop.f32.mrf.mxu0
        %v2117 = vadd.f32 %v2028, %v2116
        %2118 = vmatmul.bf16.gmra.mxu0 %v1794
        %v2119 = vpop.f32.mrf.mxu0
        %v2120 = vadd.f32 %v2031, %v2119
        %v2121 = vpop.f32.mrf.mxu0
        %v2122 = vadd.f32 %v2033, %v2121
        %2123 = vmatmul.bf16.gmra.mxu0 %v1798
        %v2124 = vpop.f32.mrf.mxu0
        %v2125 = vadd.f32 %v2036, %v2124
        %v2126 = vpop.f32.mrf.mxu0
        %v2127 = vadd.f32 %v2038, %v2126
        %2128 = vmatmul.bf16.gmra.mxu0 %v1802
        %v2129 = vpop.f32.mrf.mxu0
        %v2130 = vadd.f32 %v2041, %v2129
        %v2131 = vpop.f32.mrf.mxu0
        %v2132 = vadd.f32 %v2043, %v2131
        %2133 = vmatmul.bf16.gmra.mxu0 %v1806
        %v2134 = vpop.f32.mrf.mxu0
        %v2135 = vadd.f32 %v2046, %v2134
        %v2136 = vpop.f32.mrf.mxu0
        %v2137 = vadd.f32 %v2048, %v2136
        %2138 = vdwg.mxu0
        %2139 = vmatpush.bf16.msra.mxu0 %v1295
        %2140 = vmatpush.bf16.msra.mxu0 %v1294
        %2141 = vmatpush.bf16.msra.mxu0 %v1293
        %2142 = vmatpush.bf16.msra.mxu0 %v1292
        %2143 = vmatpush.bf16.msra.mxu0 %v1291
        %2144 = vmatpush.bf16.msra.mxu0 %v1290
        %2145 = vmatpush.bf16.msra.mxu0 %v1289
        %2146 = vmatpush.bf16.msra.mxu0 %v1288
        %2147 = vmatmul.bf16.gmra.mxu0 %v1747
        %v2148 = vpop.f32.mrf.mxu0
        %v2149 = vadd.f32 %v2060, %v2148
        %v2150 = vpop.f32.mrf.mxu0
        %v2151 = vadd.f32 %v2062, %v2150
        %2152 = vmatmul.bf16.gmra.mxu0 %v1751
        %v2153 = vpop.f32.mrf.mxu0
        %v2154 = vadd.f32 %v2065, %v2153
        %v2155 = vpop.f32.mrf.mxu0
        %v2156 = vadd.f32 %v2067, %v2155
        %2157 = vmatmul.bf16.gmra.mxu0 %v1755
        %v2158 = vpop.f32.mrf.mxu0
        %v2159 = vadd.f32 %v2070, %v2158
        %v2160 = vpop.f32.mrf.mxu0
        %v2161 = vadd.f32 %v2072, %v2160
        %2162 = vmatmul.bf16.gmra.mxu0 %v1759
        %v2163 = vpop.f32.mrf.mxu0
        %v2164 = vadd.f32 %v2075, %v2163
        %v2165 = vpop.f32.mrf.mxu0
        %v2166 = vadd.f32 %v2077, %v2165
        %2167 = vmatmul.bf16.gmra.mxu0 %v1763
        %v2168 = vpop.f32.mrf.mxu0
        %v2169 = vadd.f32 %v2080, %v2168
        %v2170 = vpop.f32.mrf.mxu0
        %v2171 = vadd.f32 %v2082, %v2170
        %2172 = vmatmul.bf16.gmra.mxu0 %v1767
        %v2173 = vpop.f32.mrf.mxu0
        %v2174 = vadd.f32 %v2085, %v2173
        %v2175 = vpop.f32.mrf.mxu0
        %v2176 = vadd.f32 %v2087, %v2175
        %2177 = vmatmul.bf16.gmra.mxu0 %v1771
        %v2178 = vpop.f32.mrf.mxu0
        %v2179 = vadd.f32 %v2090, %v2178
        %v2180 = vpop.f32.mrf.mxu0
        %v2181 = vadd.f32 %v2092, %v2180
        %2182 = vmatmul.bf16.gmra.mxu0 %v1775
        %v2183 = vpop.f32.mrf.mxu0
        %v2184 = vadd.f32 %v2095, %v2183
        %v2185 = vpop.f32.mrf.mxu0
        %v2186 = vadd.f32 %v2097, %v2185
        %2187 = vmatmul.bf16.gmra.mxu0 %v1779
        %v2188 = vpop.f32.mrf.mxu0
        %v2189 = vadd.f32 %v2100, %v2188
        %v2190 = vpop.f32.mrf.mxu0
        %v2191 = vadd.f32 %v2102, %v2190
        %2192 = vmatmul.bf16.gmra.mxu0 %v1783
        %v2193 = vpop.f32.mrf.mxu0
        %v2194 = vadd.f32 %v2105, %v2193
        %v2195 = vpop.f32.mrf.mxu0
        %v2196 = vadd.f32 %v2107, %v2195
        %2197 = vmatmul.bf16.gmra.mxu0 %v1787
        %v2198 = vpop.f32.mrf.mxu0
        %v2199 = vadd.f32 %v2110, %v2198
        %v2200 = vpop.f32.mrf.mxu0
        %v2201 = vadd.f32 %v2112, %v2200
        %2202 = vmatmul.bf16.gmra.mxu0 %v1791
        %v2203 = vpop.f32.mrf.mxu0
        %v2204 = vadd.f32 %v2115, %v2203
        %v2205 = vpop.f32.mrf.mxu0
        %v2206 = vadd.f32 %v2117, %v2205
        %2207 = vmatmul.bf16.gmra.mxu0 %v1795
        %v2208 = vpop.f32.mrf.mxu0
        %v2209 = vadd.f32 %v2120, %v2208
        %v2210 = vpop.f32.mrf.mxu0
        %v2211 = vadd.f32 %v2122, %v2210
        %2212 = vmatmul.bf16.gmra.mxu0 %v1799
        %v2213 = vpop.f32.mrf.mxu0
        %v2214 = vadd.f32 %v2125, %v2213
        %v2215 = vpop.f32.mrf.mxu0
        %v2216 = vadd.f32 %v2127, %v2215
        %2217 = vmatmul.bf16.gmra.mxu0 %v1803
        %v2218 = vpop.f32.mrf.mxu0
        %v2219 = vadd.f32 %v2130, %v2218
        %v2220 = vpop.f32.mrf.mxu0
        %v2221 = vadd.f32 %v2132, %v2220
        %2222 = vmatmul.bf16.gmra.mxu0 %v1807
        %v2223 = vpop.f32.mrf.mxu0
        %v2224 = vadd.f32 %v2135, %v2223
        %v2225 = vpop.f32.mrf.mxu0
        %v2226 = vadd.f32 %v2137, %v2225
        %2227 = vdwg.mxu0
        %v2228 = vmax.f32 %v2149, 0.0
        %v2229 = vmax.f32 %v2151, 0.0
        %v2230 = vmax.f32 %v2154, 0.0
        %v2231 = vmax.f32 %v2156, 0.0
        %v2232 = vmax.f32 %v2159, 0.0
        %v2233 = vmax.f32 %v2161, 0.0
        %v2234 = vmax.f32 %v2164, 0.0
        %v2235 = vmax.f32 %v2166, 0.0
        %v2236 = vmax.f32 %v2169, 0.0
        %v2237 = vmax.f32 %v2171, 0.0
        %v2238 = vmax.f32 %v2174, 0.0
        %v2239 = vmax.f32 %v2176, 0.0
        %v2240 = vmax.f32 %v2179, 0.0
        %v2241 = vmax.f32 %v2181, 0.0
        %v2242 = vmax.f32 %v2184, 0.0
        %v2243 = vmax.f32 %v2186, 0.0
        %v2244 = vmax.f32 %v2189, 0.0
        %v2245 = vmax.f32 %v2191, 0.0
        %v2246 = vmax.f32 %v2194, 0.0
        %v2247 = vmax.f32 %v2196, 0.0
        %v2248 = vmax.f32 %v2199, 0.0
        %v2249 = vmax.f32 %v2201, 0.0
        %v2250 = vmax.f32 %v2204, 0.0
        %v2251 = vmax.f32 %v2206, 0.0
        %v2252 = vmax.f32 %v2209, 0.0
        %v2253 = vmax.f32 %v2211, 0.0
        %v2254 = vmax.f32 %v2214, 0.0
        %v2255 = vmax.f32 %v2216, 0.0
        %v2256 = vmax.f32 %v2219, 0.0
        %v2257 = vmax.f32 %v2221, 0.0
        %v2258 = vmax.f32 %v2224, 0.0
        %v2259 = vmax.f32 %v2226, 0.0
        %v2260 = vpack.c.bf16 %v2229, %v2228
        %v2261 = vpack.c.bf16 %v2231, %v2230
        %v2262 = vpack.c.bf16 %v2233, %v2232
        %v2263 = vpack.c.bf16 %v2235, %v2234
        %v2264 = vpack.c.bf16 %v2237, %v2236
        %v2265 = vpack.c.bf16 %v2239, %v2238
        %v2266 = vpack.c.bf16 %v2241, %v2240
        %v2267 = vpack.c.bf16 %v2243, %v2242
        %v2268 = vpack.c.bf16 %v2245, %v2244
        %v2269 = vpack.c.bf16 %v2247, %v2246
        %v2270 = vpack.c.bf16 %v2249, %v2248
        %v2271 = vpack.c.bf16 %v2251, %v2250
        %v2272 = vpack.c.bf16 %v2253, %v2252
        %v2273 = vpack.c.bf16 %v2255, %v2254
        %v2274 = vpack.c.bf16 %v2257, %v2256
        %v2275 = vpack.c.bf16 %v2259, %v2258
        %v2276 = vld [vmem:[%s5] sm:$0xff]
        %v2277 = vld [vmem:[%s5 + $0x8] sm:$0xff]
        %v2278 = vld [vmem:[%s5 + $0x10] sm:$0xff]
        %v2279 = vld [vmem:[%s5 + $0x18] sm:$0xff]
        %v2280 = vld [vmem:[%s5 + $0x20] sm:$0xff]
        %v2281 = vld [vmem:[%s5 + $0x28] sm:$0xff]
        %v2282 = vld [vmem:[%s5 + $0x30] sm:$0xff]
        %v2283 = vld [vmem:[%s5 + $0x38] sm:$0xff]
        %v2284 = vld [vmem:[%s5 + $0x40] sm:$0xff]
        %v2285 = vld [vmem:[%s5 + $0x48] sm:$0xff]
        %v2286 = vld [vmem:[%s5 + $0x50] sm:$0xff]
        %v2287 = vld [vmem:[%s5 + $0x58] sm:$0xff]
        %v2288 = vld [vmem:[%s5 + $0x60] sm:$0xff]
        %v2289 = vld [vmem:[%s5 + $0x68] sm:$0xff]
        %v2290 = vld [vmem:[%s5 + $0x70] sm:$0xff]
        %v2291 = vld [vmem:[%s5 + $0x78] sm:$0xff]
        %v2292 = vld [vmem:[%s6] sm:$0xff]
        %v2293 = vld [vmem:[%s6 + $0x8] sm:$0xff]
        %v2294 = vld [vmem:[%s6 + $0x10] sm:$0xff]
        %v2295 = vld [vmem:[%s6 + $0x18] sm:$0xff]
        %v2296 = vld [vmem:[%s6 + $0x20] sm:$0xff]
        %v2297 = vld [vmem:[%s6 + $0x28] sm:$0xff]
        %v2298 = vld [vmem:[%s6 + $0x30] sm:$0xff]
        %v2299 = vld [vmem:[%s6 + $0x38] sm:$0xff]
        %v2300 = vld [vmem:[%s6 + $0x40] sm:$0xff]
        %v2301 = vld [vmem:[%s6 + $0x48] sm:$0xff]
        %v2302 = vld [vmem:[%s6 + $0x50] sm:$0xff]
        %v2303 = vld [vmem:[%s6 + $0x58] sm:$0xff]
        %v2304 = vld [vmem:[%s6 + $0x60] sm:$0xff]
        %v2305 = vld [vmem:[%s6 + $0x68] sm:$0xff]
        %v2306 = vld [vmem:[%s6 + $0x70] sm:$0xff]
        %v2307 = vld [vmem:[%s6 + $0x78] sm:$0xff]
        %2309 = vset.pattern.permute.xlu0 0
        %2310 = vperm.xlu0 %2309, %v2292
        %v2311 = vpop.permute.xlu0 %2310
        %2314 = vset.pattern.permute.xlu0 0
        %2315 = vperm.xlu0 %2314, %v2293
        %v2316 = vpop.permute.xlu0 %2315
        %2319 = vset.pattern.permute.xlu0 0
        %2320 = vperm.xlu0 %2319, %v2294
        %v2321 = vpop.permute.xlu0 %2320
        %2324 = vset.pattern.permute.xlu0 0
        %2325 = vperm.xlu0 %2324, %v2295
        %v2326 = vpop.permute.xlu0 %2325
        %2329 = vset.pattern.permute.xlu0 0
        %2330 = vperm.xlu0 %2329, %v2296
        %v2331 = vpop.permute.xlu0 %2330
        %2334 = vset.pattern.permute.xlu0 0
        %2335 = vperm.xlu0 %2334, %v2297
        %v2336 = vpop.permute.xlu0 %2335
        %2339 = vset.pattern.permute.xlu0 0
        %2340 = vperm.xlu0 %2339, %v2298
        %v2341 = vpop.permute.xlu0 %2340
        %2344 = vset.pattern.permute.xlu0 0
        %2345 = vperm.xlu0 %2344, %v2299
        %v2346 = vpop.permute.xlu0 %2345
        %2349 = vset.pattern.permute.xlu0 0
        %2350 = vperm.xlu0 %2349, %v2300
        %v2351 = vpop.permute.xlu0 %2350
        %2354 = vset.pattern.permute.xlu0 0
        %2355 = vperm.xlu0 %2354, %v2301
        %v2356 = vpop.permute.xlu0 %2355
        %2359 = vset.pattern.permute.xlu0 0
        %2360 = vperm.xlu0 %2359, %v2302
        %v2361 = vpop.permute.xlu0 %2360
        %2364 = vset.pattern.permute.xlu0 0
        %2365 = vperm.xlu0 %2364, %v2303
        %v2366 = vpop.permute.xlu0 %2365
        %2369 = vset.pattern.permute.xlu0 0
        %2370 = vperm.xlu0 %2369, %v2304
        %v2371 = vpop.permute.xlu0 %2370
        %2374 = vset.pattern.permute.xlu0 0
        %2375 = vperm.xlu0 %2374, %v2305
        %v2376 = vpop.permute.xlu0 %2375
        %2379 = vset.pattern.permute.xlu0 0
        %2380 = vperm.xlu0 %2379, %v2306
        %v2381 = vpop.permute.xlu0 %2380
        %2384 = vset.pattern.permute.xlu0 0
        %2385 = vperm.xlu0 %2384, %v2307
        %v2386 = vpop.permute.xlu0 %2385
        %v2404 = vunpack.c.l.b16 %v2276
        %v2405 = vunpack.c.h.b16 %v2276
        %v2406 = vunpack.c.l.b16 %v2277
        %v2407 = vunpack.c.h.b16 %v2277
        %v2408 = vunpack.c.l.b16 %v2278
        %v2409 = vunpack.c.h.b16 %v2278
        %v2410 = vunpack.c.l.b16 %v2279
        %v2411 = vunpack.c.h.b16 %v2279
        %v2412 = vunpack.c.l.b16 %v2280
        %v2413 = vunpack.c.h.b16 %v2280
        %v2414 = vunpack.c.l.b16 %v2281
        %v2415 = vunpack.c.h.b16 %v2281
        %v2416 = vunpack.c.l.b16 %v2282
        %v2417 = vunpack.c.h.b16 %v2282
        %v2418 = vunpack.c.l.b16 %v2283
        %v2419 = vunpack.c.h.b16 %v2283
        %v2420 = vunpack.c.l.b16 %v2284
        %v2421 = vunpack.c.h.b16 %v2284
        %v2422 = vunpack.c.l.b16 %v2285
        %v2423 = vunpack.c.h.b16 %v2285
        %v2424 = vunpack.c.l.b16 %v2286
        %v2425 = vunpack.c.h.b16 %v2286
        %v2426 = vunpack.c.l.b16 %v2287
        %v2427 = vunpack.c.h.b16 %v2287
        %v2428 = vunpack.c.l.b16 %v2288
        %v2429 = vunpack.c.h.b16 %v2288
        %v2430 = vunpack.c.l.b16 %v2289
        %v2431 = vunpack.c.h.b16 %v2289
        %v2432 = vunpack.c.l.b16 %v2290
        %v2433 = vunpack.c.h.b16 %v2290
        %v2434 = vunpack.c.l.b16 %v2291
        %v2435 = vunpack.c.h.b16 %v2291
        %v2436 = vpack.c.b16 %v2406, %v2404
        %v2437 = vpack.c.b16 %v2407, %v2405
        %v2438 = vpack.c.b16 %v2410, %v2408
        %v2439 = vpack.c.b16 %v2411, %v2409
        %v2440 = vpack.c.b16 %v2414, %v2412
        %v2441 = vpack.c.b16 %v2415, %v2413
        %v2442 = vpack.c.b16 %v2418, %v2416
        %v2443 = vpack.c.b16 %v2419, %v2417
        %v2444 = vpack.c.b16 %v2422, %v2420
        %v2445 = vpack.c.b16 %v2423, %v2421
        %v2446 = vpack.c.b16 %v2426, %v2424
        %v2447 = vpack.c.b16 %v2427, %v2425
        %v2448 = vpack.c.b16 %v2430, %v2428
        %v2449 = vpack.c.b16 %v2431, %v2429
        %v2450 = vpack.c.b16 %v2434, %v2432
        %v2451 = vpack.c.b16 %v2435, %v2433
        %2468 = vmatpush.bf16.msra.mxu0 %v2267
        %2469 = vmatpush.bf16.msra.mxu0 %v2266
        %2470 = vmatpush.bf16.msra.mxu0 %v2265
        %2471 = vmatpush.bf16.msra.mxu0 %v2264
        %2472 = vmatpush.bf16.msra.mxu0 %v2263
        %2473 = vmatpush.bf16.msra.mxu0 %v2262
        %2474 = vmatpush.bf16.msra.mxu0 %v2261
        %2475 = vmatpush.bf16.msra.mxu0 %v2260
        %2476 = vmatmul.bf16.gmra.mxu0 %v2436
        %v2477 = vpop.f32.mrf.mxu0
        %v2478 = vadd.f32 %v2311, %v2477
        %v2479 = vpop.f32.mrf.mxu0
        %v2480 = vadd.f32 %v2316, %v2479
        %2481 = vmatmul.bf16.gmra.mxu0 %v2438
        %v2482 = vpop.f32.mrf.mxu0
        %v2483 = vadd.f32 %v2321, %v2482
        %v2484 = vpop.f32.mrf.mxu0
        %v2485 = vadd.f32 %v2326, %v2484
        %2486 = vmatmul.bf16.gmra.mxu0 %v2440
        %v2487 = vpop.f32.mrf.mxu0
        %v2488 = vadd.f32 %v2331, %v2487
        %v2489 = vpop.f32.mrf.mxu0
        %v2490 = vadd.f32 %v2336, %v2489
        %2491 = vmatmul.bf16.gmra.mxu0 %v2442
        %v2492 = vpop.f32.mrf.mxu0
        %v2493 = vadd.f32 %v2341, %v2492
        %v2494 = vpop.f32.mrf.mxu0
        %v2495 = vadd.f32 %v2346, %v2494
        %2496 = vmatmul.bf16.gmra.mxu0 %v2444
        %v2497 = vpop.f32.mrf.mxu0
        %v2498 = vadd.f32 %v2351, %v2497
        %v2499 = vpop.f32.mrf.mxu0
        %v2500 = vadd.f32 %v2356, %v2499
        %2501 = vmatmul.bf16.gmra.mxu0 %v2446
        %v2502 = vpop.f32.mrf.mxu0
        %v2503 = vadd.f32 %v2361, %v2502
        %v2504 = vpop.f32.mrf.mxu0
        %v2505 = vadd.f32 %v2366, %v2504
        %2506 = vmatmul.bf16.gmra.mxu0 %v2448
        %v2507 = vpop.f32.mrf.mxu0
        %v2508 = vadd.f32 %v2371, %v2507
        %v2509 = vpop.f32.mrf.mxu0
        %v2510 = vadd.f32 %v2376, %v2509
        %2511 = vmatmul.bf16.gmra.mxu0 %v2450
        %v2512 = vpop.f32.mrf.mxu0
        %v2513 = vadd.f32 %v2381, %v2512
        %v2514 = vpop.f32.mrf.mxu0
        %v2515 = vadd.f32 %v2386, %v2514
        %2516 = vdwg.mxu0
        %2517 = vmatpush.bf16.msra.mxu0 %v2275
        %2518 = vmatpush.bf16.msra.mxu0 %v2274
        %2519 = vmatpush.bf16.msra.mxu0 %v2273
        %2520 = vmatpush.bf16.msra.mxu0 %v2272
        %2521 = vmatpush.bf16.msra.mxu0 %v2271
        %2522 = vmatpush.bf16.msra.mxu0 %v2270
        %2523 = vmatpush.bf16.msra.mxu0 %v2269
        %2524 = vmatpush.bf16.msra.mxu0 %v2268
        %2525 = vmatmul.bf16.gmra.mxu0 %v2437
        %v2526 = vpop.f32.mrf.mxu0
        %v2527 = vadd.f32 %v2478, %v2526
        %v2528 = vpop.f32.mrf.mxu0
        %v2529 = vadd.f32 %v2480, %v2528
        %2530 = vmatmul.bf16.gmra.mxu0 %v2439
        %v2531 = vpop.f32.mrf.mxu0
        %v2532 = vadd.f32 %v2483, %v2531
        %v2533 = vpop.f32.mrf.mxu0
        %v2534 = vadd.f32 %v2485, %v2533
        %2535 = vmatmul.bf16.gmra.mxu0 %v2441
        %v2536 = vpop.f32.mrf.mxu0
        %v2537 = vadd.f32 %v2488, %v2536
        %v2538 = vpop.f32.mrf.mxu0
        %v2539 = vadd.f32 %v2490, %v2538
        %2540 = vmatmul.bf16.gmra.mxu0 %v2443
        %v2541 = vpop.f32.mrf.mxu0
        %v2542 = vadd.f32 %v2493, %v2541
        %v2543 = vpop.f32.mrf.mxu0
        %v2544 = vadd.f32 %v2495, %v2543
        %2545 = vmatmul.bf16.gmra.mxu0 %v2445
        %v2546 = vpop.f32.mrf.mxu0
        %v2547 = vadd.f32 %v2498, %v2546
        %v2548 = vpop.f32.mrf.mxu0
        %v2549 = vadd.f32 %v2500, %v2548
        %2550 = vmatmul.bf16.gmra.mxu0 %v2447
        %v2551 = vpop.f32.mrf.mxu0
        %v2552 = vadd.f32 %v2503, %v2551
        %v2553 = vpop.f32.mrf.mxu0
        %v2554 = vadd.f32 %v2505, %v2553
        %2555 = vmatmul.bf16.gmra.mxu0 %v2449
        %v2556 = vpop.f32.mrf.mxu0
        %v2557 = vadd.f32 %v2508, %v2556
        %v2558 = vpop.f32.mrf.mxu0
        %v2559 = vadd.f32 %v2510, %v2558
        %2560 = vmatmul.bf16.gmra.mxu0 %v2451
        %v2561 = vpop.f32.mrf.mxu0
        %v2562 = vadd.f32 %v2513, %v2561
        %v2563 = vpop.f32.mrf.mxu0
        %v2564 = vadd.f32 %v2515, %v2563
        %2565 = vdwg.mxu0
        %v2566 = vmax.f32 %v2527, 0.0
        %v2567 = vmax.f32 %v2529, 0.0
        %v2568 = vmax.f32 %v2532, 0.0
        %v2569 = vmax.f32 %v2534, 0.0
        %v2570 = vmax.f32 %v2537, 0.0
        %v2571 = vmax.f32 %v2539, 0.0
        %v2572 = vmax.f32 %v2542, 0.0
        %v2573 = vmax.f32 %v2544, 0.0
        %v2574 = vmax.f32 %v2547, 0.0
        %v2575 = vmax.f32 %v2549, 0.0
        %v2576 = vmax.f32 %v2552, 0.0
        %v2577 = vmax.f32 %v2554, 0.0
        %v2578 = vmax.f32 %v2557, 0.0
        %v2579 = vmax.f32 %v2559, 0.0
        %v2580 = vmax.f32 %v2562, 0.0
        %v2581 = vmax.f32 %v2564, 0.0
        %v2582 = vld [vmem:[%s7] sm:$0xff]
        %v2583 = vld [vmem:[%s7 + $0x8] sm:$0xff]
        %v2584 = vld [vmem:[%s7 + $0x10] sm:$0xff]
        %v2585 = vld [vmem:[%s7 + $0x18] sm:$0xff]
        %v2586 = vld [vmem:[%s7 + $0x20] sm:$0xff]
        %v2587 = vld [vmem:[%s7 + $0x28] sm:$0xff]
        %v2588 = vld [vmem:[%s7 + $0x30] sm:$0xff]
        %v2589 = vld [vmem:[%s7 + $0x38] sm:$0xff]
        %v2590 = vld [vmem:[%s7 + $0x40] sm:$0xff]
        %v2591 = vld [vmem:[%s7 + $0x48] sm:$0xff]
        %v2592 = vld [vmem:[%s7 + $0x50] sm:$0xff]
        %v2593 = vld [vmem:[%s7 + $0x58] sm:$0xff]
        %v2594 = vld [vmem:[%s7 + $0x60] sm:$0xff]
        %v2595 = vld [vmem:[%s7 + $0x68] sm:$0xff]
        %v2596 = vld [vmem:[%s7 + $0x70] sm:$0xff]
        %v2597 = vld [vmem:[%s7 + $0x78] sm:$0xff]
        %2599 = vset.pattern.permute.xlu0 0
        %2600 = vperm.xlu0 %2599, %v2582
        %v2601 = vpop.permute.xlu0 %2600
        %2604 = vset.pattern.permute.xlu0 0
        %2605 = vperm.xlu0 %2604, %v2583
        %v2606 = vpop.permute.xlu0 %2605
        %2609 = vset.pattern.permute.xlu0 0
        %2610 = vperm.xlu0 %2609, %v2584
        %v2611 = vpop.permute.xlu0 %2610
        %2614 = vset.pattern.permute.xlu0 0
        %2615 = vperm.xlu0 %2614, %v2585
        %v2616 = vpop.permute.xlu0 %2615
        %2619 = vset.pattern.permute.xlu0 0
        %2620 = vperm.xlu0 %2619, %v2586
        %v2621 = vpop.permute.xlu0 %2620
        %2624 = vset.pattern.permute.xlu0 0
        %2625 = vperm.xlu0 %2624, %v2587
        %v2626 = vpop.permute.xlu0 %2625
        %2629 = vset.pattern.permute.xlu0 0
        %2630 = vperm.xlu0 %2629, %v2588
        %v2631 = vpop.permute.xlu0 %2630
        %2634 = vset.pattern.permute.xlu0 0
        %2635 = vperm.xlu0 %2634, %v2589
        %v2636 = vpop.permute.xlu0 %2635
        %2639 = vset.pattern.permute.xlu0 0
        %2640 = vperm.xlu0 %2639, %v2590
        %v2641 = vpop.permute.xlu0 %2640
        %2644 = vset.pattern.permute.xlu0 0
        %2645 = vperm.xlu0 %2644, %v2591
        %v2646 = vpop.permute.xlu0 %2645
        %2649 = vset.pattern.permute.xlu0 0
        %2650 = vperm.xlu0 %2649, %v2592
        %v2651 = vpop.permute.xlu0 %2650
        %2654 = vset.pattern.permute.xlu0 0
        %2655 = vperm.xlu0 %2654, %v2593
        %v2656 = vpop.permute.xlu0 %2655
        %2659 = vset.pattern.permute.xlu0 0
        %2660 = vperm.xlu0 %2659, %v2594
        %v2661 = vpop.permute.xlu0 %2660
        %2664 = vset.pattern.permute.xlu0 0
        %2665 = vperm.xlu0 %2664, %v2595
        %v2666 = vpop.permute.xlu0 %2665
        %2669 = vset.pattern.permute.xlu0 0
        %2670 = vperm.xlu0 %2669, %v2596
        %v2671 = vpop.permute.xlu0 %2670
        %2674 = vset.pattern.permute.xlu0 0
        %2675 = vperm.xlu0 %2674, %v2597
        %v2676 = vpop.permute.xlu0 %2675
        %v2678 = vmul.f32 %v2566, %v2601
        %v2679 = vmul.f32 %v2567, %v2606
        %v2680 = vmul.f32 %v2568, %v2611
        %v2681 = vmul.f32 %v2569, %v2616
        %v2682 = vmul.f32 %v2570, %v2621
        %v2683 = vmul.f32 %v2571, %v2626
        %v2684 = vmul.f32 %v2572, %v2631
        %v2685 = vmul.f32 %v2573, %v2636
        %v2686 = vmul.f32 %v2574, %v2641
        %v2687 = vmul.f32 %v2575, %v2646
        %v2688 = vmul.f32 %v2576, %v2651
        %v2689 = vmul.f32 %v2577, %v2656
        %v2690 = vmul.f32 %v2578, %v2661
        %v2691 = vmul.f32 %v2579, %v2666
        %v2692 = vmul.f32 %v2580, %v2671
        %v2693 = vmul.f32 %v2581, %v2676
        %v2694 = vadd.f32 %v2678, %v2679
        %v2695 = vadd.f32 %v2694, %v2680
        %v2696 = vadd.f32 %v2695, %v2681
        %v2697 = vadd.f32 %v2696, %v2682
        %v2698 = vadd.f32 %v2697, %v2683
        %v2699 = vadd.f32 %v2698, %v2684
        %v2700 = vadd.f32 %v2699, %v2685
        %v2701 = vadd.f32 %v2700, %v2686
        %v2702 = vadd.f32 %v2701, %v2687
        %v2703 = vadd.f32 %v2702, %v2688
        %v2704 = vadd.f32 %v2703, %v2689
        %v2705 = vadd.f32 %v2704, %v2690
        %v2706 = vadd.f32 %v2705, %v2691
        %v2707 = vadd.f32 %v2706, %v2692
        %v2708 = vadd.f32 %v2707, %v2693
        %v2709 = vrot.slane %v2708, 4
        %v2710 = vadd.f32 %v2708, %v2709
        %v2711 = vrot.slane %v2710, 2
        %v2712 = vadd.f32 %v2710, %v2711
        %v2713 = vrot.slane %v2712, 1
        %v2714 = vadd.f32 %v2712, %v2713
        %s2715 = sld [smem:[#allocation2]]
        %v2716 = vstv %s2715
        %v2717 = vadd.f32 %v2714, %v2716
        %2718 = vst [vmem:[%s310] sm:$0x1] %v2717
        %s2719 = sand.u32 %s221, 1
        %s2720 = scalar_lea.sflag [#allocation4], %s2719
        %s2721 = sand.u32 %s221, 1
        %s2722 = scalar_lea.vmem [#allocation3], %s2721
        // Predicated region
        $region57: #{tpu_custom_call.1} parent=55 // pred_check
          %p2723 = pneg %p231
        $region58: #{tpu_custom_call.1} parent=55 // pred_check_branch
          %2725 = sbr.rel (%p2723) target = $region60
        $region59: #{tpu_custom_call.1} parent=55 // pred_region
          %2727 = vsyncadd %s2720, 0
          %s2728 = scalar_lea.hbm %s9, %s24
          %s2730 = sshll.u32 %s2722, 4
          %s2731 = int_to_ptr.vmem [resolvable:$true] %s2730
          %s2732 = sshll.u32 %s2728, 4
          %s2733 = int_to_ptr.hbm [resolvable:$true] %s2732
          %2735 = dma.vmem_to_hbm [thread:$0]  %s2731, 16, %s2733, %s2720
        $region60: #{tpu_custom_call.1} parent=55 // pred_fallthru
          _
      $region56: #{tpu_custom_call.1} parent=5 // pred_fallthru
        _
      %p2736 = scmp.le.s32.totalorder 2, %s19
      // Predicated region
      $region61: #{tpu_custom_call.1} parent=5 // pred_check
        %p2737 = pneg %p2736
      $region62: #{tpu_custom_call.1} parent=5 // pred_check_branch
        %2739 = sbr.rel (%p2737) target = $region64
      $region63: #{tpu_custom_call.1} parent=5 // pred_region
        %s2740 = ssub.s32 %s19, 2
        // Predicated region
        $region65: #{tpu_custom_call.1} parent=63 // pred_check
          %p2741 = pneg %p237
        $region66: #{tpu_custom_call.1} parent=63 // pred_check_branch
          %2743 = sbr.rel (%p2741) target = $region68
        $region67: #{tpu_custom_call.1} parent=63 // pred_region
          %s2744 = sand.u32 %s222, 1
          %s2745 = scalar_lea.sflag [#allocation4], %s2744
          %s2746 = sand.u32 %s222, 1
          %s2747 = scalar_lea.vmem [#allocation3], %s2746
          %2749 = dma.done %s2745, 16
        $region68: #{tpu_custom_call.1} parent=63 // pred_fallthru
          _
      $region64: #{tpu_custom_call.1} parent=5 // pred_fallthru
        _
    $region6: #{tpu_custom_call.1} parent=1 // loop_footer
      %s23 = sadd.s32 1, %s19
    $region7: #{tpu_custom_call.1} parent=1 // loop_footer_branch
      %18 = sbr.rel target = $region3
    $region8: #{tpu_custom_call.1} parent=1 // loop_exit
      _
    %2750 = vsyncpa [#allocation4], 1
    %s2751 = scalar_lea.sflag [#allocation4], 1
    %2752 = vsyncpa %s2751, 1

</llo_original>
